<compile_context>
chip_gen: v7x
topology: tpu7x:2x2x1
jax: 0.10.0
libtpu: 0.0.40
codegen_flags: <defaults>
</compile_context>

<pallas_src>
import jax
import jax.numpy as jnp
from jax.experimental import pallas as pl
from jax.experimental.pallas import tpu as pltpu


# -----------------------------------------------------------------------------
# Fused bidirectional LSTM layer kernel (optionally with the Linear head)
# -----------------------------------------------------------------------------
def _make_bidir_lstm_kernel(seq_len: int, batch: int, hidden: int,
                            with_head: bool):
    """One full bidirectional LSTM layer inside a single kernel.

    Layout (all flattened time-major):
      x_ref   : (T*B, D_in)  f32, row t*B+b = input at time t, batch b
      wih_ref : (D_in, 8H)   bf16, cols [0:4H] fwd gates, [4H:8H] rev gates,
                             per-direction gate column order (i, f, o, g)
      whh_ref : (2H, 8H)     bf16 block-diagonal (fwd block, rev block)
      b_ref   : (1, 8H)      f32 combined bias (b_ih + b_hh), same ordering
      h0_ref / c0_ref : (B, 2H) f32, [:, :H] fwd state, [:, H:] rev state
      out_ref : (T*B, 2H)    f32, [:, :H] fwd hidden, [:, H:] rev hidden
      (head)  wlin_ref (2H, O) bf16, blin_ref (1, O) f32, pred_ref (B, O) f32
      xp_scr  : (T*B, 8H)    f32 scratch holding the hoisted input projection
    """
    T, B, H = seq_len, batch, hidden
    H2, H3, H4, H8 = 2 * hidden, 3 * hidden, 4 * hidden, 8 * hidden

    def recurrence(x_ref, wih_ref, whh_ref, b_ref, h0_ref, c0_ref,
                   out_ref, xp_scr, head_refs):
        # ---- hoisted input projection: ONE GEMM for all T steps, both dirs --
        xp_scr[...] = (
            jnp.dot(x_ref[...].astype(jnp.bfloat16), wih_ref[...],
                    preferred_element_type=jnp.float32)
            + b_ref[...])

        # h/c carried as values (vregs); [:, :H] forward, [:, H:] reverse.
        h = h0_ref[...]
        c = c0_ref[...]

        def gate_update(pre, c_prev):
            # pre: (B, 4H) with gate column order (i, f, o, g)
            sig = jax.nn.sigmoid(pre[:, 0:H3])        # i | f | o in one call
            g = jnp.tanh(pre[:, H3:H4])
            c_new = sig[:, H:H2] * c_prev + sig[:, 0:H] * g
            h_new = sig[:, H2:H3] * jnp.tanh(c_new)
            return h_new, c_new

        h_f_last = None
        h_r_last = None

        # Statically unrolled time loop (T small & fixed): full scheduler
        # visibility, only h @ W_hh remains on the serial critical path.
        for i in range(T):
            t_f = i
            t_r = T - 1 - i
            hh = jnp.dot(h.astype(jnp.bfloat16), whh_ref[...],
                         preferred_element_type=jnp.float32)        # (B, 8H)
            pre_f = xp_scr[t_f * B:(t_f + 1) * B, 0:H4] + hh[:, 0:H4]
            pre_r = xp_scr[t_r * B:(t_r + 1) * B, H4:H8] + hh[:, H4:H8]
            h_f, c_f = gate_update(pre_f, c[:, 0:H])
            h_r, c_r = gate_update(pre_r, c[:, H:H2])
            h = jnp.concatenate([h_f, h_r], axis=-1)
            c = jnp.concatenate([c_f, c_r], axis=-1)
            out_ref[t_f * B:(t_f + 1) * B, 0:H] = h_f.astype(out_ref.dtype)
            out_ref[t_r * B:(t_r + 1) * B, H:H2] = h_r.astype(out_ref.dtype)
            if i == 0:
                h_r_last = h_r            # reverse hidden at time T-1
            if i == T - 1:
                h_f_last = h_f            # forward hidden at time T-1

        # ---- fused Linear head on the last time step (last layer only) -----
        if head_refs is not None:
            wlin_ref, blin_ref, pred_ref = head_refs
            last = jnp.concatenate([h_f_last, h_r_last], axis=-1)   # (B, 2H)
            pred_ref[...] = (
                jnp.dot(last.astype(jnp.bfloat16), wlin_ref[...],
                        preferred_element_type=jnp.float32)
                + blin_ref[...]).astype(pred_ref.dtype)

    if with_head:
        def kernel(x_ref, wih_ref, whh_ref, b_ref, h0_ref, c0_ref,
                   wlin_ref, blin_ref, out_ref, pred_ref, xp_scr):
            recurrence(x_ref, wih_ref, whh_ref, b_ref, h0_ref, c0_ref,
                       out_ref, xp_scr, (wlin_ref, blin_ref, pred_ref))
    else:
        def kernel(x_ref, wih_ref, whh_ref, b_ref, h0_ref, c0_ref,
                   out_ref, xp_scr):
            recurrence(x_ref, wih_ref, whh_ref, b_ref, h0_ref, c0_ref,
                       out_ref, xp_scr, None)
    return kernel


def bidir_lstm_layer(x_flat, w_ih_c, w_hh_c, b_c, h0_c, c0_c, *, seq_len,
                     head=None):
    """x_flat: (T*B, D_in) f32.  Returns (T*B, 2H) f32 (and (B, O) if head)."""
    TB, _ = x_flat.shape
    B = TB // seq_len
    H = h0_c.shape[-1] // 2
    with_head = head is not None
    kernel = _make_bidir_lstm_kernel(seq_len, B, H, with_head)
    vmem = pl.BlockSpec(memory_space=pltpu.MemorySpace.VMEM)

    inputs = [x_flat, w_ih_c, w_hh_c, b_c, h0_c, c0_c]
    if with_head:
        w_lin_t, b_lin = head
        inputs += [w_lin_t, b_lin]
        out_shape = (jax.ShapeDtypeStruct((TB, 2 * H), jnp.float32),
                     jax.ShapeDtypeStruct((B, b_lin.shape[-1]), jnp.float32))
        out_specs = (vmem, vmem)
    else:
        out_shape = jax.ShapeDtypeStruct((TB, 2 * H), jnp.float32)
        out_specs = vmem

    return pl.pallas_call(
        kernel,
        out_shape=out_shape,
        in_specs=[vmem] * len(inputs),
        out_specs=out_specs,
        scratch_shapes=[pltpu.VMEM((TB, 8 * H), jnp.float32)],  # hoisted X@W_ih
        compiler_params=pltpu.CompilerParams(
            # Resident set is ~200 KiB at these shapes; 16 MiB is well under
            # every generation's scoped VMEM (incl. v7x's 64 MiB physical).
            vmem_limit_bytes=16 * 1024 * 1024),
    )(*inputs)


# -----------------------------------------------------------------------------
# BiLSTM module (parameters built deterministically in-script)
# -----------------------------------------------------------------------------
class BiLSTMPallas:
    def __init__(self, input_size, hidden_size, num_layers, output_size,
                 batch_size, key):
        self.input_size = input_size
        self.hidden_size = hidden_size
        self.num_layers = num_layers
        self.output_size = output_size
        self.num_directions = 2
        self.batch_size = batch_size

        H = hidden_size
        bound = 1.0 / float(H) ** 0.5   # PyTorch default uniform bound

        def uniform(subkey, shape):
            return jax.random.uniform(subkey, shape, jnp.float32, -bound, bound)

        def reorder(w):  # PyTorch gate order (i, f, g, o) -> (i, f, o, g)
            return jnp.concatenate(
                [w[0:H], w[H:2 * H], w[3 * H:4 * H], w[2 * H:3 * H]], axis=0)

        # layers[l] = (w_ih_c (D_in, 8H) bf16, w_hh_c (2H, 8H) bf16, b_c (1, 8H) f32)
        self.layers = []
        for l in range(num_layers):
            in_l = input_size if l == 0 else 2 * H
            raw = []
            for _ in range(self.num_directions):
                key, k1, k2, k3, k4 = jax.random.split(key, 5)
                w_ih = uniform(k1, (4 * H, in_l))   # PyTorch shapes
                w_hh = uniform(k2, (4 * H, H))
                b_ih = uniform(k3, (4 * H,))
                b_hh = uniform(k4, (4 * H,))
                raw.append((w_ih, w_hh, b_ih + b_hh))
            (wih_f, whh_f, b_f), (wih_r, whh_r, b_r) = raw
            w_ih_c = jnp.concatenate([reorder(wih_f).T, reorder(wih_r).T],
                                     axis=1)                       # (in_l, 8H)
            w_hh_c = jnp.zeros((2 * H, 8 * H), jnp.float32)        # block diag
            w_hh_c = w_hh_c.at[0:H, 0:4 * H].set(reorder(whh_f).T)
            w_hh_c = w_hh_c.at[H:2 * H, 4 * H:8 * H].set(reorder(whh_r).T)
            b_c = jnp.concatenate([reorder(b_f), reorder(b_r)]).reshape(1, 8 * H)
            self.layers.append((w_ih_c.astype(jnp.bfloat16),
                                w_hh_c.astype(jnp.bfloat16),
                                b_c))

        key, k1, k2 = jax.random.split(key, 3)
        kl = 1.0 / float(2 * H) ** 0.5
        w_lin = jax.random.uniform(k1, (output_size, 2 * H), jnp.float32,
                                   -kl, kl)
        b_lin = jax.random.uniform(k2, (output_size,), jnp.float32, -kl, kl)
        self.w_lin_t = jnp.transpose(w_lin).astype(jnp.bfloat16)   # (2H, O)
        self.b_lin = b_lin.reshape(1, output_size)                 # (1, O)

    def forward(self, input_seq, state_key):
        """input_seq: (B, T, input_size) -> (B, output_size)."""
        B, T, _ = input_seq.shape
        H = self.hidden_size
        L = self.num_layers
        B_pad = ((B + 7) // 8) * 8          # fill all 8 f32 sublanes
        pad = B_pad - B

        # Reference module draws fresh random h_0 / c_0 every forward call;
        # here they are drawn deterministically from `state_key`.
        k1, k2 = jax.random.split(state_key)
        h0 = jax.random.normal(k1, (self.num_directions * L, B, H), jnp.float32)
        c0 = jax.random.normal(k2, (self.num_directions * L, B, H), jnp.float32)

        # Time-major, batch padded, flattened to (T*B_pad, D).
        x = jnp.transpose(input_seq.astype(jnp.float32), (1, 0, 2))
        x = jnp.pad(x, ((0, 0), (0, pad), (0, 0)))
        x = x.reshape(T * B_pad, self.input_size)
        h0 = jnp.pad(h0, ((0, 0), (0, pad), (0, 0)))
        c0 = jnp.pad(c0, ((0, 0), (0, pad), (0, 0)))

        layer_in = x
        pred = None
        for l in range(L):
            w_ih_c, w_hh_c, b_c = self.layers[l]
            idx_f = l * self.num_directions        # PyTorch h0/c0 ordering
            idx_r = idx_f + 1
            h0_c = jnp.concatenate([h0[idx_f], h0[idx_r]], axis=-1)  # (Bp, 2H)
            c0_c = jnp.concatenate([c0[idx_f], c0[idx_r]], axis=-1)
            head = (self.w_lin_t, self.b_lin) if l == L - 1 else None
            res = bidir_lstm_layer(layer_in, w_ih_c, w_hh_c, b_c, h0_c, c0_c,
                                   seq_len=T, head=head)
            if head is None:
                layer_in = res                       # (T*Bp, 2H) -> next layer
            else:
                layer_in, pred = res
        return pred[:B]                              # strip batch padding


# -----------------------------------------------------------------------------
# Demo
# -----------------------------------------------------------------------------
if __name__ == "__main__":
    INPUT_SIZE = 4
    HIDDEN_SIZE = 32
    NUM_LAYERS = 2
    OUTPUT_SIZE = 1
    BATCH = 2
    SEQ = 8

    root = jax.random.PRNGKey(0)
    k_params, k_input, k_state = jax.random.split(root, 3)

    model = BiLSTMPallas(INPUT_SIZE, HIDDEN_SIZE, NUM_LAYERS, OUTPUT_SIZE,
                         BATCH, k_params)

    x = jax.random.normal(k_input, (BATCH, SEQ, INPUT_SIZE), jnp.float32)

    pred = model.forward(x, k_state)
    pred = jax.block_until_ready(pred)

    assert pred.shape == (BATCH, OUTPUT_SIZE)
    assert bool(jnp.all(jnp.isfinite(pred)))
    print("KERNEL_OK")
</pallas_src>

<mosaic_0001>
module attributes {stable_mosaic.version = 11 : i64} {
  func.func @kernel(%arg0: memref<64x4xf32, #tpu.memory_space<vmem>>, %arg1: memref<4x256xbf16, #tpu.memory_space<vmem>>, %arg2: memref<64x256xbf16, #tpu.memory_space<vmem>>, %arg3: memref<1x256xf32, #tpu.memory_space<vmem>>, %arg4: memref<8x64xf32, #tpu.memory_space<vmem>>, %arg5: memref<8x64xf32, #tpu.memory_space<vmem>>, %arg6: memref<64x64xf32, #tpu.memory_space<vmem>>, %arg7: memref<64x256xf32, #tpu.memory_space<vmem>>) attributes {dimension_semantics = [], scalar_prefetch = 0 : i64, scratch_operands = 1 : i64, tpu.core_type = #tpu.core_type<tc>} {
    %c0 = arith.constant 0 : index
    %c0_0 = arith.constant 0 : index
    %0 = vector.load %arg0[%c0, %c0_0] : memref<64x4xf32, #tpu.memory_space<vmem>>, vector<64x4xf32>
    %1 = arith.truncf %0 : vector<64x4xf32> to vector<64x4xbf16>
    %c0_1 = arith.constant 0 : index
    %c0_2 = arith.constant 0 : index
    %2 = vector.load %arg1[%c0_1, %c0_2] : memref<4x256xbf16, #tpu.memory_space<vmem>>, vector<4x256xbf16>
    %cst = arith.constant dense<0.000000e+00> : vector<64x256xf32>
    %3 = tpu.matmul %1, %2, %cst {dimension_numbers = #tpu.dot_dimension_numbers<[1], [0], [0], [1], [0, 0, 1, 1], [], []>} : vector<64x4xbf16>, vector<4x256xbf16>, vector<64x256xf32> -> vector<64x256xf32>
    %c0_3 = arith.constant 0 : index
    %c0_4 = arith.constant 0 : index
    %4 = vector.load %arg3[%c0_3, %c0_4] : memref<1x256xf32, #tpu.memory_space<vmem>>, vector<1x256xf32>
    %5 = vector.broadcast %4 : vector<1x256xf32> to vector<64x256xf32>
    %6 = arith.addf %3, %5 : vector<64x256xf32>
    %c0_5 = arith.constant 0 : index
    %c0_6 = arith.constant 0 : index
    %7 = vector.load %arg7[%c0_5, %c0_6] : memref<64x256xf32, #tpu.memory_space<vmem>>, vector<64x256xf32>
    tpu.vector_store %arg7[%c0_5, %c0_6], %6 {strides = array<i32>} : memref<64x256xf32, #tpu.memory_space<vmem>>, vector<64x256xf32>,
    %c0_7 = arith.constant 0 : index
    %c0_8 = arith.constant 0 : index
    %8 = vector.load %arg4[%c0_7, %c0_8] : memref<8x64xf32, #tpu.memory_space<vmem>>, vector<8x64xf32>
    %c0_9 = arith.constant 0 : index
    %c0_10 = arith.constant 0 : index
    %9 = vector.load %arg5[%c0_9, %c0_10] : memref<8x64xf32, #tpu.memory_space<vmem>>, vector<8x64xf32>
    %10 = arith.truncf %8 : vector<8x64xf32> to vector<8x64xbf16>
    %c0_11 = arith.constant 0 : index
    %c0_12 = arith.constant 0 : index
    %11 = vector.load %arg2[%c0_11, %c0_12] : memref<64x256xbf16, #tpu.memory_space<vmem>>, vector<64x256xbf16>
    %cst_13 = arith.constant dense<0.000000e+00> : vector<8x256xf32>
    %12 = tpu.matmul %10, %11, %cst_13 {dimension_numbers = #tpu.dot_dimension_numbers<[1], [0], [0], [1], [0, 0, 1, 1], [], []>} : vector<8x64xbf16>, vector<64x256xbf16>, vector<8x256xf32> -> vector<8x256xf32>
    %c0_14 = arith.constant 0 : index
    %c0_15 = arith.constant 0 : index
    %13 = vector.load %arg7[%c0_14, %c0_15] : memref<64x256xf32, #tpu.memory_space<vmem>>, vector<8x128xf32>
    %14 = vector.extract_strided_slice %12 {offsets = [0, 0], sizes = [8, 128], strides = [1, 1]} : vector<8x256xf32> to vector<8x128xf32>
    %15 = arith.addf %13, %14 : vector<8x128xf32>
    %c56 = arith.constant 56 : index
    %c128 = arith.constant 128 : index
    %16 = vector.load %arg7[%c56, %c128] : memref<64x256xf32, #tpu.memory_space<vmem>>, vector<8x128xf32>
    %17 = vector.extract_strided_slice %12 {offsets = [0, 128], sizes = [8, 128], strides = [1, 1]} : vector<8x256xf32> to vector<8x128xf32>
    %18 = arith.addf %16, %17 : vector<8x128xf32>
    %19 = vector.extract_strided_slice %9 {offsets = [0, 0], sizes = [8, 32], strides = [1, 1]} : vector<8x64xf32> to vector<8x32xf32>
    %20 = vector.extract_strided_slice %15 {offsets = [0, 0], sizes = [8, 96], strides = [1, 1]} : vector<8x128xf32> to vector<8x96xf32>
    %21 = arith.negf %20 : vector<8x96xf32>
    %22 = math.exp %21 : vector<8x96xf32>
    %cst_16 = arith.constant 1.000000e+00 : f32
    %23 = vector.broadcast %cst_16 : f32 to vector<8x96xf32>
    %24 = arith.addf %23, %22 : vector<8x96xf32>
    %25 = arith.divf %23, %24 : vector<8x96xf32>
    %26 = vector.extract_strided_slice %15 {offsets = [0, 96], sizes = [8, 32], strides = [1, 1]} : vector<8x128xf32> to vector<8x32xf32>
    %27 = math.tanh %26 : vector<8x32xf32>
    %28 = vector.extract_strided_slice %25 {offsets = [0, 32], sizes = [8, 32], strides = [1, 1]} : vector<8x96xf32> to vector<8x32xf32>
    %29 = arith.mulf %28, %19 : vector<8x32xf32>
    %30 = vector.extract_strided_slice %25 {offsets = [0, 0], sizes = [8, 32], strides = [1, 1]} : vector<8x96xf32> to vector<8x32xf32>
    %31 = arith.mulf %30, %27 : vector<8x32xf32>
    %32 = arith.addf %29, %31 : vector<8x32xf32>
    %33 = vector.extract_strided_slice %25 {offsets = [0, 64], sizes = [8, 32], strides = [1, 1]} : vector<8x96xf32> to vector<8x32xf32>
    %34 = math.tanh %32 : vector<8x32xf32>
    %35 = arith.mulf %33, %34 : vector<8x32xf32>
    %36 = vector.extract_strided_slice %9 {offsets = [0, 32], sizes = [8, 32], strides = [1, 1]} : vector<8x64xf32> to vector<8x32xf32>
    %37 = vector.extract_strided_slice %18 {offsets = [0, 0], sizes = [8, 96], strides = [1, 1]} : vector<8x128xf32> to vector<8x96xf32>
    %38 = arith.negf %37 : vector<8x96xf32>
    %39 = math.exp %38 : vector<8x96xf32>
    %cst_17 = arith.constant 1.000000e+00 : f32
    %40 = vector.broadcast %cst_17 : f32 to vector<8x96xf32>
    %41 = arith.addf %40, %39 : vector<8x96xf32>
    %42 = arith.divf %40, %41 : vector<8x96xf32>
    %43 = vector.extract_strided_slice %18 {offsets = [0, 96], sizes = [8, 32], strides = [1, 1]} : vector<8x128xf32> to vector<8x32xf32>
    %44 = math.tanh %43 : vector<8x32xf32>
    %45 = vector.extract_strided_slice %42 {offsets = [0, 32], sizes = [8, 32], strides = [1, 1]} : vector<8x96xf32> to vector<8x32xf32>
    %46 = arith.mulf %45, %36 : vector<8x32xf32>
    %47 = vector.extract_strided_slice %42 {offsets = [0, 0], sizes = [8, 32], strides = [1, 1]} : vector<8x96xf32> to vector<8x32xf32>
    %48 = arith.mulf %47, %44 : vector<8x32xf32>
    %49 = arith.addf %46, %48 : vector<8x32xf32>
    %50 = vector.extract_strided_slice %42 {offsets = [0, 64], sizes = [8, 32], strides = [1, 1]} : vector<8x96xf32> to vector<8x32xf32>
    %51 = math.tanh %49 : vector<8x32xf32>
    %52 = arith.mulf %50, %51 : vector<8x32xf32>
    %53 = tpu.concatenate %35, %52 in 1 : vector<8x32xf32>, vector<8x32xf32> -> vector<8x64xf32>
    %54 = tpu.concatenate %32, %49 in 1 : vector<8x32xf32>, vector<8x32xf32> -> vector<8x64xf32>
    %c0_18 = arith.constant 0 : index
    %c0_19 = arith.constant 0 : index
    %55 = vector.load %arg6[%c0_18, %c0_19] : memref<64x64xf32, #tpu.memory_space<vmem>>, vector<8x32xf32>
    tpu.vector_store %arg6[%c0_18, %c0_19], %35 {strides = array<i32>} : memref<64x64xf32, #tpu.memory_space<vmem>>, vector<8x32xf32>,
    %c56_20 = arith.constant 56 : index
    %c32 = arith.constant 32 : index
    %56 = vector.load %arg6[%c56_20, %c32] : memref<64x64xf32, #tpu.memory_space<vmem>>, vector<8x32xf32>
    tpu.vector_store %arg6[%c56_20, %c32], %52 {strides = array<i32>} : memref<64x64xf32, #tpu.memory_space<vmem>>, vector<8x32xf32>,
    %57 = arith.truncf %53 : vector<8x64xf32> to vector<8x64xbf16>
    %c0_21 = arith.constant 0 : index
    %c0_22 = arith.constant 0 : index
    %58 = vector.load %arg2[%c0_21, %c0_22] : memref<64x256xbf16, #tpu.memory_space<vmem>>, vector<64x256xbf16>
    %cst_23 = arith.constant dense<0.000000e+00> : vector<8x256xf32>
    %59 = tpu.matmul %57, %58, %cst_23 {dimension_numbers = #tpu.dot_dimension_numbers<[1], [0], [0], [1], [0, 0, 1, 1], [], []>} : vector<8x64xbf16>, vector<64x256xbf16>, vector<8x256xf32> -> vector<8x256xf32>
    %c8 = arith.constant 8 : index
    %c0_24 = arith.constant 0 : index
    %60 = vector.load %arg7[%c8, %c0_24] : memref<64x256xf32, #tpu.memory_space<vmem>>, vector<8x128xf32>
    %61 = vector.extract_strided_slice %59 {offsets = [0, 0], sizes = [8, 128], strides = [1, 1]} : vector<8x256xf32> to vector<8x128xf32>
    %62 = arith.addf %60, %61 : vector<8x128xf32>
    %c48 = arith.constant 48 : index
    %c128_25 = arith.constant 128 : index
    %63 = vector.load %arg7[%c48, %c128_25] : memref<64x256xf32, #tpu.memory_space<vmem>>, vector<8x128xf32>
    %64 = vector.extract_strided_slice %59 {offsets = [0, 128], sizes = [8, 128], strides = [1, 1]} : vector<8x256xf32> to vector<8x128xf32>
    %65 = arith.addf %63, %64 : vector<8x128xf32>
    %66 = vector.extract_strided_slice %54 {offsets = [0, 0], sizes = [8, 32], strides = [1, 1]} : vector<8x64xf32> to vector<8x32xf32>
    %67 = vector.extract_strided_slice %62 {offsets = [0, 0], sizes = [8, 96], strides = [1, 1]} : vector<8x128xf32> to vector<8x96xf32>
    %68 = arith.negf %67 : vector<8x96xf32>
    %69 = math.exp %68 : vector<8x96xf32>
    %cst_26 = arith.constant 1.000000e+00 : f32
    %70 = vector.broadcast %cst_26 : f32 to vector<8x96xf32>
    %71 = arith.addf %70, %69 : vector<8x96xf32>
    %72 = arith.divf %70, %71 : vector<8x96xf32>
    %73 = vector.extract_strided_slice %62 {offsets = [0, 96], sizes = [8, 32], strides = [1, 1]} : vector<8x128xf32> to vector<8x32xf32>
    %74 = math.tanh %73 : vector<8x32xf32>
    %75 = vector.extract_strided_slice %72 {offsets = [0, 32], sizes = [8, 32], strides = [1, 1]} : vector<8x96xf32> to vector<8x32xf32>
    %76 = arith.mulf %75, %66 : vector<8x32xf32>
    %77 = vector.extract_strided_slice %72 {offsets = [0, 0], sizes = [8, 32], strides = [1, 1]} : vector<8x96xf32> to vector<8x32xf32>
    %78 = arith.mulf %77, %74 : vector<8x32xf32>
    %79 = arith.addf %76, %78 : vector<8x32xf32>
    %80 = vector.extract_strided_slice %72 {offsets = [0, 64], sizes = [8, 32], strides = [1, 1]} : vector<8x96xf32> to vector<8x32xf32>
    %81 = math.tanh %79 : vector<8x32xf32>
    %82 = arith.mulf %80, %81 : vector<8x32xf32>
    %83 = vector.extract_strided_slice %54 {offsets = [0, 32], sizes = [8, 32], strides = [1, 1]} : vector<8x64xf32> to vector<8x32xf32>
    %84 = vector.extract_strided_slice %65 {offsets = [0, 0], sizes = [8, 96], strides = [1, 1]} : vector<8x128xf32> to vector<8x96xf32>
    %85 = arith.negf %84 : vector<8x96xf32>
    %86 = math.exp %85 : vector<8x96xf32>
    %cst_27 = arith.constant 1.000000e+00 : f32
    %87 = vector.broadcast %cst_27 : f32 to vector<8x96xf32>
    %88 = arith.addf %87, %86 : vector<8x96xf32>
    %89 = arith.divf %87, %88 : vector<8x96xf32>
    %90 = vector.extract_strided_slice %65 {offsets = [0, 96], sizes = [8, 32], strides = [1, 1]} : vector<8x128xf32> to vector<8x32xf32>
    %91 = math.tanh %90 : vector<8x32xf32>
    %92 = vector.extract_strided_slice %89 {offsets = [0, 32], sizes = [8, 32], strides = [1, 1]} : vector<8x96xf32> to vector<8x32xf32>
    %93 = arith.mulf %92, %83 : vector<8x32xf32>
    %94 = vector.extract_strided_slice %89 {offsets = [0, 0], sizes = [8, 32], strides = [1, 1]} : vector<8x96xf32> to vector<8x32xf32>
    %95 = arith.mulf %94, %91 : vector<8x32xf32>
    %96 = arith.addf %93, %95 : vector<8x32xf32>
    %97 = vector.extract_strided_slice %89 {offsets = [0, 64], sizes = [8, 32], strides = [1, 1]} : vector<8x96xf32> to vector<8x32xf32>
    %98 = math.tanh %96 : vector<8x32xf32>
    %99 = arith.mulf %97, %98 : vector<8x32xf32>
    %100 = tpu.concatenate %82, %99 in 1 : vector<8x32xf32>, vector<8x32xf32> -> vector<8x64xf32>
    %101 = tpu.concatenate %79, %96 in 1 : vector<8x32xf32>, vector<8x32xf32> -> vector<8x64xf32>
    %c8_28 = arith.constant 8 : index
    %c0_29 = arith.constant 0 : index
    %102 = vector.load %arg6[%c8_28, %c0_29] : memref<64x64xf32, #tpu.memory_space<vmem>>, vector<8x32xf32>
    tpu.vector_store %arg6[%c8_28, %c0_29], %82 {strides = array<i32>} : memref<64x64xf32, #tpu.memory_space<vmem>>, vector<8x32xf32>,
    %c48_30 = arith.constant 48 : index
    %c32_31 = arith.constant 32 : index
    %103 = vector.load %arg6[%c48_30, %c32_31] : memref<64x64xf32, #tpu.memory_space<vmem>>, vector<8x32xf32>
    tpu.vector_store %arg6[%c48_30, %c32_31], %99 {strides = array<i32>} : memref<64x64xf32, #tpu.memory_space<vmem>>, vector<8x32xf32>,
    %104 = arith.truncf %100 : vector<8x64xf32> to vector<8x64xbf16>
    %c0_32 = arith.constant 0 : index
    %c0_33 = arith.constant 0 : index
    %105 = vector.load %arg2[%c0_32, %c0_33] : memref<64x256xbf16, #tpu.memory_space<vmem>>, vector<64x256xbf16>
    %cst_34 = arith.constant dense<0.000000e+00> : vector<8x256xf32>
    %106 = tpu.matmul %104, %105, %cst_34 {dimension_numbers = #tpu.dot_dimension_numbers<[1], [0], [0], [1], [0, 0, 1, 1], [], []>} : vector<8x64xbf16>, vector<64x256xbf16>, vector<8x256xf32> -> vector<8x256xf32>
    %c16 = arith.constant 16 : index
    %c0_35 = arith.constant 0 : index
    %107 = vector.load %arg7[%c16, %c0_35] : memref<64x256xf32, #tpu.memory_space<vmem>>, vector<8x128xf32>
    %108 = vector.extract_strided_slice %106 {offsets = [0, 0], sizes = [8, 128], strides = [1, 1]} : vector<8x256xf32> to vector<8x128xf32>
    %109 = arith.addf %107, %108 : vector<8x128xf32>
    %c40 = arith.constant 40 : index
    %c128_36 = arith.constant 128 : index
    %110 = vector.load %arg7[%c40, %c128_36] : memref<64x256xf32, #tpu.memory_space<vmem>>, vector<8x128xf32>
    %111 = vector.extract_strided_slice %106 {offsets = [0, 128], sizes = [8, 128], strides = [1, 1]} : vector<8x256xf32> to vector<8x128xf32>
    %112 = arith.addf %110, %111 : vector<8x128xf32>
    %113 = vector.extract_strided_slice %101 {offsets = [0, 0], sizes = [8, 32], strides = [1, 1]} : vector<8x64xf32> to vector<8x32xf32>
    %114 = vector.extract_strided_slice %109 {offsets = [0, 0], sizes = [8, 96], strides = [1, 1]} : vector<8x128xf32> to vector<8x96xf32>
    %115 = arith.negf %114 : vector<8x96xf32>
    %116 = math.exp %115 : vector<8x96xf32>
    %cst_37 = arith.constant 1.000000e+00 : f32
    %117 = vector.broadcast %cst_37 : f32 to vector<8x96xf32>
    %118 = arith.addf %117, %116 : vector<8x96xf32>
    %119 = arith.divf %117, %118 : vector<8x96xf32>
    %120 = vector.extract_strided_slice %109 {offsets = [0, 96], sizes = [8, 32], strides = [1, 1]} : vector<8x128xf32> to vector<8x32xf32>
    %121 = math.tanh %120 : vector<8x32xf32>
    %122 = vector.extract_strided_slice %119 {offsets = [0, 32], sizes = [8, 32], strides = [1, 1]} : vector<8x96xf32> to vector<8x32xf32>
    %123 = arith.mulf %122, %113 : vector<8x32xf32>
    %124 = vector.extract_strided_slice %119 {offsets = [0, 0], sizes = [8, 32], strides = [1, 1]} : vector<8x96xf32> to vector<8x32xf32>
    %125 = arith.mulf %124, %121 : vector<8x32xf32>
    %126 = arith.addf %123, %125 : vector<8x32xf32>
    %127 = vector.extract_strided_slice %119 {offsets = [0, 64], sizes = [8, 32], strides = [1, 1]} : vector<8x96xf32> to vector<8x32xf32>
    %128 = math.tanh %126 : vector<8x32xf32>
    %129 = arith.mulf %127, %128 : vector<8x32xf32>
    %130 = vector.extract_strided_slice %101 {offsets = [0, 32], sizes = [8, 32], strides = [1, 1]} : vector<8x64xf32> to vector<8x32xf32>
    %131 = vector.extract_strided_slice %112 {offsets = [0, 0], sizes = [8, 96], strides = [1, 1]} : vector<8x128xf32> to vector<8x96xf32>
    %132 = arith.negf %131 : vector<8x96xf32>
    %133 = math.exp %132 : vector<8x96xf32>
    %cst_38 = arith.constant 1.000000e+00 : f32
    %134 = vector.broadcast %cst_38 : f32 to vector<8x96xf32>
    %135 = arith.addf %134, %133 : vector<8x96xf32>
    %136 = arith.divf %134, %135 : vector<8x96xf32>
    %137 = vector.extract_strided_slice %112 {offsets = [0, 96], sizes = [8, 32], strides = [1, 1]} : vector<8x128xf32> to vector<8x32xf32>
    %138 = math.tanh %137 : vector<8x32xf32>
    %139 = vector.extract_strided_slice %136 {offsets = [0, 32], sizes = [8, 32], strides = [1, 1]} : vector<8x96xf32> to vector<8x32xf32>
    %140 = arith.mulf %139, %130 : vector<8x32xf32>
    %141 = vector.extract_strided_slice %136 {offsets = [0, 0], sizes = [8, 32], strides = [1, 1]} : vector<8x96xf32> to vector<8x32xf32>
    %142 = arith.mulf %141, %138 : vector<8x32xf32>
    %143 = arith.addf %140, %142 : vector<8x32xf32>
    %144 = vector.extract_strided_slice %136 {offsets = [0, 64], sizes = [8, 32], strides = [1, 1]} : vector<8x96xf32> to vector<8x32xf32>
    %145 = math.tanh %143 : vector<8x32xf32>
    %146 = arith.mulf %144, %145 : vector<8x32xf32>
    %147 = tpu.concatenate %129, %146 in 1 : vector<8x32xf32>, vector<8x32xf32> -> vector<8x64xf32>
    %148 = tpu.concatenate %126, %143 in 1 : vector<8x32xf32>, vector<8x32xf32> -> vector<8x64xf32>
    %c16_39 = arith.constant 16 : index
    %c0_40 = arith.constant 0 : index
    %149 = vector.load %arg6[%c16_39, %c0_40] : memref<64x64xf32, #tpu.memory_space<vmem>>, vector<8x32xf32>
    tpu.vector_store %arg6[%c16_39, %c0_40], %129 {strides = array<i32>} : memref<64x64xf32, #tpu.memory_space<vmem>>, vector<8x32xf32>,
    %c40_41 = arith.constant 40 : index
    %c32_42 = arith.constant 32 : index
    %150 = vector.load %arg6[%c40_41, %c32_42] : memref<64x64xf32, #tpu.memory_space<vmem>>, vector<8x32xf32>
    tpu.vector_store %arg6[%c40_41, %c32_42], %146 {strides = array<i32>} : memref<64x64xf32, #tpu.memory_space<vmem>>, vector<8x32xf32>,
    %151 = arith.truncf %147 : vector<8x64xf32> to vector<8x64xbf16>
    %c0_43 = arith.constant 0 : index
    %c0_44 = arith.constant 0 : index
    %152 = vector.load %arg2[%c0_43, %c0_44] : memref<64x256xbf16, #tpu.memory_space<vmem>>, vector<64x256xbf16>
    %cst_45 = arith.constant dense<0.000000e+00> : vector<8x256xf32>
    %153 = tpu.matmul %151, %152, %cst_45 {dimension_numbers = #tpu.dot_dimension_numbers<[1], [0], [0], [1], [0, 0, 1, 1], [], []>} : vector<8x64xbf16>, vector<64x256xbf16>, vector<8x256xf32> -> vector<8x256xf32>
    %c24 = arith.constant 24 : index
    %c0_46 = arith.constant 0 : index
    %154 = vector.load %arg7[%c24, %c0_46] : memref<64x256xf32, #tpu.memory_space<vmem>>, vector<8x128xf32>
    %155 = vector.extract_strided_slice %153 {offsets = [0, 0], sizes = [8, 128], strides = [1, 1]} : vector<8x256xf32> to vector<8x128xf32>
    %156 = arith.addf %154, %155 : vector<8x128xf32>
    %c32_47 = arith.constant 32 : index
    %c128_48 = arith.constant 128 : index
    %157 = vector.load %arg7[%c32_47, %c128_48] : memref<64x256xf32, #tpu.memory_space<vmem>>, vector<8x128xf32>
    %158 = vector.extract_strided_slice %153 {offsets = [0, 128], sizes = [8, 128], strides = [1, 1]} : vector<8x256xf32> to vector<8x128xf32>
    %159 = arith.addf %157, %158 : vector<8x128xf32>
    %160 = vector.extract_strided_slice %148 {offsets = [0, 0], sizes = [8, 32], strides = [1, 1]} : vector<8x64xf32> to vector<8x32xf32>
    %161 = vector.extract_strided_slice %156 {offsets = [0, 0], sizes = [8, 96], strides = [1, 1]} : vector<8x128xf32> to vector<8x96xf32>
    %162 = arith.negf %161 : vector<8x96xf32>
    %163 = math.exp %162 : vector<8x96xf32>
    %cst_49 = arith.constant 1.000000e+00 : f32
    %164 = vector.broadcast %cst_49 : f32 to vector<8x96xf32>
    %165 = arith.addf %164, %163 : vector<8x96xf32>
    %166 = arith.divf %164, %165 : vector<8x96xf32>
    %167 = vector.extract_strided_slice %156 {offsets = [0, 96], sizes = [8, 32], strides = [1, 1]} : vector<8x128xf32> to vector<8x32xf32>
    %168 = math.tanh %167 : vector<8x32xf32>
    %169 = vector.extract_strided_slice %166 {offsets = [0, 32], sizes = [8, 32], strides = [1, 1]} : vector<8x96xf32> to vector<8x32xf32>
    %170 = arith.mulf %169, %160 : vector<8x32xf32>
    %171 = vector.extract_strided_slice %166 {offsets = [0, 0], sizes = [8, 32], strides = [1, 1]} : vector<8x96xf32> to vector<8x32xf32>
    %172 = arith.mulf %171, %168 : vector<8x32xf32>
    %173 = arith.addf %170, %172 : vector<8x32xf32>
    %174 = vector.extract_strided_slice %166 {offsets = [0, 64], sizes = [8, 32], strides = [1, 1]} : vector<8x96xf32> to vector<8x32xf32>
    %175 = math.tanh %173 : vector<8x32xf32>
    %176 = arith.mulf %174, %175 : vector<8x32xf32>
    %177 = vector.extract_strided_slice %148 {offsets = [0, 32], sizes = [8, 32], strides = [1, 1]} : vector<8x64xf32> to vector<8x32xf32>
    %178 = vector.extract_strided_slice %159 {offsets = [0, 0], sizes = [8, 96], strides = [1, 1]} : vector<8x128xf32> to vector<8x96xf32>
    %179 = arith.negf %178 : vector<8x96xf32>
    %180 = math.exp %179 : vector<8x96xf32>
    %cst_50 = arith.constant 1.000000e+00 : f32
    %181 = vector.broadcast %cst_50 : f32 to vector<8x96xf32>
    %182 = arith.addf %181, %180 : vector<8x96xf32>
    %183 = arith.divf %181, %182 : vector<8x96xf32>
    %184 = vector.extract_strided_slice %159 {offsets = [0, 96], sizes = [8, 32], strides = [1, 1]} : vector<8x128xf32> to vector<8x32xf32>
    %185 = math.tanh %184 : vector<8x32xf32>
    %186 = vector.extract_strided_slice %183 {offsets = [0, 32], sizes = [8, 32], strides = [1, 1]} : vector<8x96xf32> to vector<8x32xf32>
    %187 = arith.mulf %186, %177 : vector<8x32xf32>
    %188 = vector.extract_strided_slice %183 {offsets = [0, 0], sizes = [8, 32], strides = [1, 1]} : vector<8x96xf32> to vector<8x32xf32>
    %189 = arith.mulf %188, %185 : vector<8x32xf32>
    %190 = arith.addf %187, %189 : vector<8x32xf32>
    %191 = vector.extract_strided_slice %183 {offsets = [0, 64], sizes = [8, 32], strides = [1, 1]} : vector<8x96xf32> to vector<8x32xf32>
    %192 = math.tanh %190 : vector<8x32xf32>
    %193 = arith.mulf %191, %192 : vector<8x32xf32>
    %194 = tpu.concatenate %176, %193 in 1 : vector<8x32xf32>, vector<8x32xf32> -> vector<8x64xf32>
    %195 = tpu.concatenate %173, %190 in 1 : vector<8x32xf32>, vector<8x32xf32> -> vector<8x64xf32>
    %c24_51 = arith.constant 24 : index
    %c0_52 = arith.constant 0 : index
    %196 = vector.load %arg6[%c24_51, %c0_52] : memref<64x64xf32, #tpu.memory_space<vmem>>, vector<8x32xf32>
    tpu.vector_store %arg6[%c24_51, %c0_52], %176 {strides = array<i32>} : memref<64x64xf32, #tpu.memory_space<vmem>>, vector<8x32xf32>,
    %c32_53 = arith.constant 32 : index
    %c32_54 = arith.constant 32 : index
    %197 = vector.load %arg6[%c32_53, %c32_54] : memref<64x64xf32, #tpu.memory_space<vmem>>, vector<8x32xf32>
    tpu.vector_store %arg6[%c32_53, %c32_54], %193 {strides = array<i32>} : memref<64x64xf32, #tpu.memory_space<vmem>>, vector<8x32xf32>,
    %198 = arith.truncf %194 : vector<8x64xf32> to vector<8x64xbf16>
    %c0_55 = arith.constant 0 : index
    %c0_56 = arith.constant 0 : index
    %199 = vector.load %arg2[%c0_55, %c0_56] : memref<64x256xbf16, #tpu.memory_space<vmem>>, vector<64x256xbf16>
    %cst_57 = arith.constant dense<0.000000e+00> : vector<8x256xf32>
    %200 = tpu.matmul %198, %199, %cst_57 {dimension_numbers = #tpu.dot_dimension_numbers<[1], [0], [0], [1], [0, 0, 1, 1], [], []>} : vector<8x64xbf16>, vector<64x256xbf16>, vector<8x256xf32> -> vector<8x256xf32>
    %c32_58 = arith.constant 32 : index
    %c0_59 = arith.constant 0 : index
    %201 = vector.load %arg7[%c32_58, %c0_59] : memref<64x256xf32, #tpu.memory_space<vmem>>, vector<8x128xf32>
    %202 = vector.extract_strided_slice %200 {offsets = [0, 0], sizes = [8, 128], strides = [1, 1]} : vector<8x256xf32> to vector<8x128xf32>
    %203 = arith.addf %201, %202 : vector<8x128xf32>
    %c24_60 = arith.constant 24 : index
    %c128_61 = arith.constant 128 : index
    %204 = vector.load %arg7[%c24_60, %c128_61] : memref<64x256xf32, #tpu.memory_space<vmem>>, vector<8x128xf32>
    %205 = vector.extract_strided_slice %200 {offsets = [0, 128], sizes = [8, 128], strides = [1, 1]} : vector<8x256xf32> to vector<8x128xf32>
    %206 = arith.addf %204, %205 : vector<8x128xf32>
    %207 = vector.extract_strided_slice %195 {offsets = [0, 0], sizes = [8, 32], strides = [1, 1]} : vector<8x64xf32> to vector<8x32xf32>
    %208 = vector.extract_strided_slice %203 {offsets = [0, 0], sizes = [8, 96], strides = [1, 1]} : vector<8x128xf32> to vector<8x96xf32>
    %209 = arith.negf %208 : vector<8x96xf32>
    %210 = math.exp %209 : vector<8x96xf32>
    %cst_62 = arith.constant 1.000000e+00 : f32
    %211 = vector.broadcast %cst_62 : f32 to vector<8x96xf32>
    %212 = arith.addf %211, %210 : vector<8x96xf32>
    %213 = arith.divf %211, %212 : vector<8x96xf32>
    %214 = vector.extract_strided_slice %203 {offsets = [0, 96], sizes = [8, 32], strides = [1, 1]} : vector<8x128xf32> to vector<8x32xf32>
    %215 = math.tanh %214 : vector<8x32xf32>
    %216 = vector.extract_strided_slice %213 {offsets = [0, 32], sizes = [8, 32], strides = [1, 1]} : vector<8x96xf32> to vector<8x32xf32>
    %217 = arith.mulf %216, %207 : vector<8x32xf32>
    %218 = vector.extract_strided_slice %213 {offsets = [0, 0], sizes = [8, 32], strides = [1, 1]} : vector<8x96xf32> to vector<8x32xf32>
    %219 = arith.mulf %218, %215 : vector<8x32xf32>
    %220 = arith.addf %217, %219 : vector<8x32xf32>
    %221 = vector.extract_strided_slice %213 {offsets = [0, 64], sizes = [8, 32], strides = [1, 1]} : vector<8x96xf32> to vector<8x32xf32>
    %222 = math.tanh %220 : vector<8x32xf32>
    %223 = arith.mulf %221, %222 : vector<8x32xf32>
    %224 = vector.extract_strided_slice %195 {offsets = [0, 32], sizes = [8, 32], strides = [1, 1]} : vector<8x64xf32> to vector<8x32xf32>
    %225 = vector.extract_strided_slice %206 {offsets = [0, 0], sizes = [8, 96], strides = [1, 1]} : vector<8x128xf32> to vector<8x96xf32>
    %226 = arith.negf %225 : vector<8x96xf32>
    %227 = math.exp %226 : vector<8x96xf32>
    %cst_63 = arith.constant 1.000000e+00 : f32
    %228 = vector.broadcast %cst_63 : f32 to vector<8x96xf32>
    %229 = arith.addf %228, %227 : vector<8x96xf32>
    %230 = arith.divf %228, %229 : vector<8x96xf32>
    %231 = vector.extract_strided_slice %206 {offsets = [0, 96], sizes = [8, 32], strides = [1, 1]} : vector<8x128xf32> to vector<8x32xf32>
    %232 = math.tanh %231 : vector<8x32xf32>
    %233 = vector.extract_strided_slice %230 {offsets = [0, 32], sizes = [8, 32], strides = [1, 1]} : vector<8x96xf32> to vector<8x32xf32>
    %234 = arith.mulf %233, %224 : vector<8x32xf32>
    %235 = vector.extract_strided_slice %230 {offsets = [0, 0], sizes = [8, 32], strides = [1, 1]} : vector<8x96xf32> to vector<8x32xf32>
    %236 = arith.mulf %235, %232 : vector<8x32xf32>
    %237 = arith.addf %234, %236 : vector<8x32xf32>
    %238 = vector.extract_strided_slice %230 {offsets = [0, 64], sizes = [8, 32], strides = [1, 1]} : vector<8x96xf32> to vector<8x32xf32>
    %239 = math.tanh %237 : vector<8x32xf32>
    %240 = arith.mulf %238, %239 : vector<8x32xf32>
    %241 = tpu.concatenate %223, %240 in 1 : vector<8x32xf32>, vector<8x32xf32> -> vector<8x64xf32>
    %242 = tpu.concatenate %220, %237 in 1 : vector<8x32xf32>, vector<8x32xf32> -> vector<8x64xf32>
    %c32_64 = arith.constant 32 : index
    %c0_65 = arith.constant 0 : index
    %243 = vector.load %arg6[%c32_64, %c0_65] : memref<64x64xf32, #tpu.memory_space<vmem>>, vector<8x32xf32>
    tpu.vector_store %arg6[%c32_64, %c0_65], %223 {strides = array<i32>} : memref<64x64xf32, #tpu.memory_space<vmem>>, vector<8x32xf32>,
    %c24_66 = arith.constant 24 : index
    %c32_67 = arith.constant 32 : index
    %244 = vector.load %arg6[%c24_66, %c32_67] : memref<64x64xf32, #tpu.memory_space<vmem>>, vector<8x32xf32>
    tpu.vector_store %arg6[%c24_66, %c32_67], %240 {strides = array<i32>} : memref<64x64xf32, #tpu.memory_space<vmem>>, vector<8x32xf32>,
    %245 = arith.truncf %241 : vector<8x64xf32> to vector<8x64xbf16>
    %c0_68 = arith.constant 0 : index
    %c0_69 = arith.constant 0 : index
    %246 = vector.load %arg2[%c0_68, %c0_69] : memref<64x256xbf16, #tpu.memory_space<vmem>>, vector<64x256xbf16>
    %cst_70 = arith.constant dense<0.000000e+00> : vector<8x256xf32>
    %247 = tpu.matmul %245, %246, %cst_70 {dimension_numbers = #tpu.dot_dimension_numbers<[1], [0], [0], [1], [0, 0, 1, 1], [], []>} : vector<8x64xbf16>, vector<64x256xbf16>, vector<8x256xf32> -> vector<8x256xf32>
    %c40_71 = arith.constant 40 : index
    %c0_72 = arith.constant 0 : index
    %248 = vector.load %arg7[%c40_71, %c0_72] : memref<64x256xf32, #tpu.memory_space<vmem>>, vector<8x128xf32>
    %249 = vector.extract_strided_slice %247 {offsets = [0, 0], sizes = [8, 128], strides = [1, 1]} : vector<8x256xf32> to vector<8x128xf32>
    %250 = arith.addf %248, %249 : vector<8x128xf32>
    %c16_73 = arith.constant 16 : index
    %c128_74 = arith.constant 128 : index
    %251 = vector.load %arg7[%c16_73, %c128_74] : memref<64x256xf32, #tpu.memory_space<vmem>>, vector<8x128xf32>
    %252 = vector.extract_strided_slice %247 {offsets = [0, 128], sizes = [8, 128], strides = [1, 1]} : vector<8x256xf32> to vector<8x128xf32>
    %253 = arith.addf %251, %252 : vector<8x128xf32>
    %254 = vector.extract_strided_slice %242 {offsets = [0, 0], sizes = [8, 32], strides = [1, 1]} : vector<8x64xf32> to vector<8x32xf32>
    %255 = vector.extract_strided_slice %250 {offsets = [0, 0], sizes = [8, 96], strides = [1, 1]} : vector<8x128xf32> to vector<8x96xf32>
    %256 = arith.negf %255 : vector<8x96xf32>
    %257 = math.exp %256 : vector<8x96xf32>
    %cst_75 = arith.constant 1.000000e+00 : f32
    %258 = vector.broadcast %cst_75 : f32 to vector<8x96xf32>
    %259 = arith.addf %258, %257 : vector<8x96xf32>
    %260 = arith.divf %258, %259 : vector<8x96xf32>
    %261 = vector.extract_strided_slice %250 {offsets = [0, 96], sizes = [8, 32], strides = [1, 1]} : vector<8x128xf32> to vector<8x32xf32>
    %262 = math.tanh %261 : vector<8x32xf32>
    %263 = vector.extract_strided_slice %260 {offsets = [0, 32], sizes = [8, 32], strides = [1, 1]} : vector<8x96xf32> to vector<8x32xf32>
    %264 = arith.mulf %263, %254 : vector<8x32xf32>
    %265 = vector.extract_strided_slice %260 {offsets = [0, 0], sizes = [8, 32], strides = [1, 1]} : vector<8x96xf32> to vector<8x32xf32>
    %266 = arith.mulf %265, %262 : vector<8x32xf32>
    %267 = arith.addf %264, %266 : vector<8x32xf32>
    %268 = vector.extract_strided_slice %260 {offsets = [0, 64], sizes = [8, 32], strides = [1, 1]} : vector<8x96xf32> to vector<8x32xf32>
    %269 = math.tanh %267 : vector<8x32xf32>
    %270 = arith.mulf %268, %269 : vector<8x32xf32>
    %271 = vector.extract_strided_slice %242 {offsets = [0, 32], sizes = [8, 32], strides = [1, 1]} : vector<8x64xf32> to vector<8x32xf32>
    %272 = vector.extract_strided_slice %253 {offsets = [0, 0], sizes = [8, 96], strides = [1, 1]} : vector<8x128xf32> to vector<8x96xf32>
    %273 = arith.negf %272 : vector<8x96xf32>
    %274 = math.exp %273 : vector<8x96xf32>
    %cst_76 = arith.constant 1.000000e+00 : f32
    %275 = vector.broadcast %cst_76 : f32 to vector<8x96xf32>
    %276 = arith.addf %275, %274 : vector<8x96xf32>
    %277 = arith.divf %275, %276 : vector<8x96xf32>
    %278 = vector.extract_strided_slice %253 {offsets = [0, 96], sizes = [8, 32], strides = [1, 1]} : vector<8x128xf32> to vector<8x32xf32>
    %279 = math.tanh %278 : vector<8x32xf32>
    %280 = vector.extract_strided_slice %277 {offsets = [0, 32], sizes = [8, 32], strides = [1, 1]} : vector<8x96xf32> to vector<8x32xf32>
    %281 = arith.mulf %280, %271 : vector<8x32xf32>
    %282 = vector.extract_strided_slice %277 {offsets = [0, 0], sizes = [8, 32], strides = [1, 1]} : vector<8x96xf32> to vector<8x32xf32>
    %283 = arith.mulf %282, %279 : vector<8x32xf32>
    %284 = arith.addf %281, %283 : vector<8x32xf32>
    %285 = vector.extract_strided_slice %277 {offsets = [0, 64], sizes = [8, 32], strides = [1, 1]} : vector<8x96xf32> to vector<8x32xf32>
    %286 = math.tanh %284 : vector<8x32xf32>
    %287 = arith.mulf %285, %286 : vector<8x32xf32>
    %288 = tpu.concatenate %270, %287 in 1 : vector<8x32xf32>, vector<8x32xf32> -> vector<8x64xf32>
    %289 = tpu.concatenate %267, %284 in 1 : vector<8x32xf32>, vector<8x32xf32> -> vector<8x64xf32>
    %c40_77 = arith.constant 40 : index
    %c0_78 = arith.constant 0 : index
    %290 = vector.load %arg6[%c40_77, %c0_78] : memref<64x64xf32, #tpu.memory_space<vmem>>, vector<8x32xf32>
    tpu.vector_store %arg6[%c40_77, %c0_78], %270 {strides = array<i32>} : memref<64x64xf32, #tpu.memory_space<vmem>>, vector<8x32xf32>,
    %c16_79 = arith.constant 16 : index
    %c32_80 = arith.constant 32 : index
    %291 = vector.load %arg6[%c16_79, %c32_80] : memref<64x64xf32, #tpu.memory_space<vmem>>, vector<8x32xf32>
    tpu.vector_store %arg6[%c16_79, %c32_80], %287 {strides = array<i32>} : memref<64x64xf32, #tpu.memory_space<vmem>>, vector<8x32xf32>,
    %292 = arith.truncf %288 : vector<8x64xf32> to vector<8x64xbf16>
    %c0_81 = arith.constant 0 : index
    %c0_82 = arith.constant 0 : index
    %293 = vector.load %arg2[%c0_81, %c0_82] : memref<64x256xbf16, #tpu.memory_space<vmem>>, vector<64x256xbf16>
    %cst_83 = arith.constant dense<0.000000e+00> : vector<8x256xf32>
    %294 = tpu.matmul %292, %293, %cst_83 {dimension_numbers = #tpu.dot_dimension_numbers<[1], [0], [0], [1], [0, 0, 1, 1], [], []>} : vector<8x64xbf16>, vector<64x256xbf16>, vector<8x256xf32> -> vector<8x256xf32>
    %c48_84 = arith.constant 48 : index
    %c0_85 = arith.constant 0 : index
    %295 = vector.load %arg7[%c48_84, %c0_85] : memref<64x256xf32, #tpu.memory_space<vmem>>, vector<8x128xf32>
    %296 = vector.extract_strided_slice %294 {offsets = [0, 0], sizes = [8, 128], strides = [1, 1]} : vector<8x256xf32> to vector<8x128xf32>
    %297 = arith.addf %295, %296 : vector<8x128xf32>
    %c8_86 = arith.constant 8 : index
    %c128_87 = arith.constant 128 : index
    %298 = vector.load %arg7[%c8_86, %c128_87] : memref<64x256xf32, #tpu.memory_space<vmem>>, vector<8x128xf32>
    %299 = vector.extract_strided_slice %294 {offsets = [0, 128], sizes = [8, 128], strides = [1, 1]} : vector<8x256xf32> to vector<8x128xf32>
    %300 = arith.addf %298, %299 : vector<8x128xf32>
    %301 = vector.extract_strided_slice %289 {offsets = [0, 0], sizes = [8, 32], strides = [1, 1]} : vector<8x64xf32> to vector<8x32xf32>
    %302 = vector.extract_strided_slice %297 {offsets = [0, 0], sizes = [8, 96], strides = [1, 1]} : vector<8x128xf32> to vector<8x96xf32>
    %303 = arith.negf %302 : vector<8x96xf32>
    %304 = math.exp %303 : vector<8x96xf32>
    %cst_88 = arith.constant 1.000000e+00 : f32
    %305 = vector.broadcast %cst_88 : f32 to vector<8x96xf32>
    %306 = arith.addf %305, %304 : vector<8x96xf32>
    %307 = arith.divf %305, %306 : vector<8x96xf32>
    %308 = vector.extract_strided_slice %297 {offsets = [0, 96], sizes = [8, 32], strides = [1, 1]} : vector<8x128xf32> to vector<8x32xf32>
    %309 = math.tanh %308 : vector<8x32xf32>
    %310 = vector.extract_strided_slice %307 {offsets = [0, 32], sizes = [8, 32], strides = [1, 1]} : vector<8x96xf32> to vector<8x32xf32>
    %311 = arith.mulf %310, %301 : vector<8x32xf32>
    %312 = vector.extract_strided_slice %307 {offsets = [0, 0], sizes = [8, 32], strides = [1, 1]} : vector<8x96xf32> to vector<8x32xf32>
    %313 = arith.mulf %312, %309 : vector<8x32xf32>
    %314 = arith.addf %311, %313 : vector<8x32xf32>
    %315 = vector.extract_strided_slice %307 {offsets = [0, 64], sizes = [8, 32], strides = [1, 1]} : vector<8x96xf32> to vector<8x32xf32>
    %316 = math.tanh %314 : vector<8x32xf32>
    %317 = arith.mulf %315, %316 : vector<8x32xf32>
    %318 = vector.extract_strided_slice %289 {offsets = [0, 32], sizes = [8, 32], strides = [1, 1]} : vector<8x64xf32> to vector<8x32xf32>
    %319 = vector.extract_strided_slice %300 {offsets = [0, 0], sizes = [8, 96], strides = [1, 1]} : vector<8x128xf32> to vector<8x96xf32>
    %320 = arith.negf %319 : vector<8x96xf32>
    %321 = math.exp %320 : vector<8x96xf32>
    %cst_89 = arith.constant 1.000000e+00 : f32
    %322 = vector.broadcast %cst_89 : f32 to vector<8x96xf32>
    %323 = arith.addf %322, %321 : vector<8x96xf32>
    %324 = arith.divf %322, %323 : vector<8x96xf32>
    %325 = vector.extract_strided_slice %300 {offsets = [0, 96], sizes = [8, 32], strides = [1, 1]} : vector<8x128xf32> to vector<8x32xf32>
    %326 = math.tanh %325 : vector<8x32xf32>
    %327 = vector.extract_strided_slice %324 {offsets = [0, 32], sizes = [8, 32], strides = [1, 1]} : vector<8x96xf32> to vector<8x32xf32>
    %328 = arith.mulf %327, %318 : vector<8x32xf32>
    %329 = vector.extract_strided_slice %324 {offsets = [0, 0], sizes = [8, 32], strides = [1, 1]} : vector<8x96xf32> to vector<8x32xf32>
    %330 = arith.mulf %329, %326 : vector<8x32xf32>
    %331 = arith.addf %328, %330 : vector<8x32xf32>
    %332 = vector.extract_strided_slice %324 {offsets = [0, 64], sizes = [8, 32], strides = [1, 1]} : vector<8x96xf32> to vector<8x32xf32>
    %333 = math.tanh %331 : vector<8x32xf32>
    %334 = arith.mulf %332, %333 : vector<8x32xf32>
    %335 = tpu.concatenate %317, %334 in 1 : vector<8x32xf32>, vector<8x32xf32> -> vector<8x64xf32>
    %336 = tpu.concatenate %314, %331 in 1 : vector<8x32xf32>, vector<8x32xf32> -> vector<8x64xf32>
    %c48_90 = arith.constant 48 : index
    %c0_91 = arith.constant 0 : index
    %337 = vector.load %arg6[%c48_90, %c0_91] : memref<64x64xf32, #tpu.memory_space<vmem>>, vector<8x32xf32>
    tpu.vector_store %arg6[%c48_90, %c0_91], %317 {strides = array<i32>} : memref<64x64xf32, #tpu.memory_space<vmem>>, vector<8x32xf32>,
    %c8_92 = arith.constant 8 : index
    %c32_93 = arith.constant 32 : index
    %338 = vector.load %arg6[%c8_92, %c32_93] : memref<64x64xf32, #tpu.memory_space<vmem>>, vector<8x32xf32>
    tpu.vector_store %arg6[%c8_92, %c32_93], %334 {strides = array<i32>} : memref<64x64xf32, #tpu.memory_space<vmem>>, vector<8x32xf32>,
    %339 = arith.truncf %335 : vector<8x64xf32> to vector<8x64xbf16>
    %c0_94 = arith.constant 0 : index
    %c0_95 = arith.constant 0 : index
    %340 = vector.load %arg2[%c0_94, %c0_95] : memref<64x256xbf16, #tpu.memory_space<vmem>>, vector<64x256xbf16>
    %cst_96 = arith.constant dense<0.000000e+00> : vector<8x256xf32>
    %341 = tpu.matmul %339, %340, %cst_96 {dimension_numbers = #tpu.dot_dimension_numbers<[1], [0], [0], [1], [0, 0, 1, 1], [], []>} : vector<8x64xbf16>, vector<64x256xbf16>, vector<8x256xf32> -> vector<8x256xf32>
    %c56_97 = arith.constant 56 : index
    %c0_98 = arith.constant 0 : index
    %342 = vector.load %arg7[%c56_97, %c0_98] : memref<64x256xf32, #tpu.memory_space<vmem>>, vector<8x128xf32>
    %343 = vector.extract_strided_slice %341 {offsets = [0, 0], sizes = [8, 128], strides = [1, 1]} : vector<8x256xf32> to vector<8x128xf32>
    %344 = arith.addf %342, %343 : vector<8x128xf32>
    %c0_99 = arith.constant 0 : index
    %c128_100 = arith.constant 128 : index
    %345 = vector.load %arg7[%c0_99, %c128_100] : memref<64x256xf32, #tpu.memory_space<vmem>>, vector<8x128xf32>
    %346 = vector.extract_strided_slice %341 {offsets = [0, 128], sizes = [8, 128], strides = [1, 1]} : vector<8x256xf32> to vector<8x128xf32>
    %347 = arith.addf %345, %346 : vector<8x128xf32>
    %348 = vector.extract_strided_slice %336 {offsets = [0, 0], sizes = [8, 32], strides = [1, 1]} : vector<8x64xf32> to vector<8x32xf32>
    %349 = vector.extract_strided_slice %344 {offsets = [0, 0], sizes = [8, 96], strides = [1, 1]} : vector<8x128xf32> to vector<8x96xf32>
    %350 = arith.negf %349 : vector<8x96xf32>
    %351 = math.exp %350 : vector<8x96xf32>
    %cst_101 = arith.constant 1.000000e+00 : f32
    %352 = vector.broadcast %cst_101 : f32 to vector<8x96xf32>
    %353 = arith.addf %352, %351 : vector<8x96xf32>
    %354 = arith.divf %352, %353 : vector<8x96xf32>
    %355 = vector.extract_strided_slice %344 {offsets = [0, 96], sizes = [8, 32], strides = [1, 1]} : vector<8x128xf32> to vector<8x32xf32>
    %356 = math.tanh %355 : vector<8x32xf32>
    %357 = vector.extract_strided_slice %354 {offsets = [0, 32], sizes = [8, 32], strides = [1, 1]} : vector<8x96xf32> to vector<8x32xf32>
    %358 = arith.mulf %357, %348 : vector<8x32xf32>
    %359 = vector.extract_strided_slice %354 {offsets = [0, 0], sizes = [8, 32], strides = [1, 1]} : vector<8x96xf32> to vector<8x32xf32>
    %360 = arith.mulf %359, %356 : vector<8x32xf32>
    %361 = arith.addf %358, %360 : vector<8x32xf32>
    %362 = vector.extract_strided_slice %354 {offsets = [0, 64], sizes = [8, 32], strides = [1, 1]} : vector<8x96xf32> to vector<8x32xf32>
    %363 = math.tanh %361 : vector<8x32xf32>
    %364 = arith.mulf %362, %363 : vector<8x32xf32>
    %365 = vector.extract_strided_slice %336 {offsets = [0, 32], sizes = [8, 32], strides = [1, 1]} : vector<8x64xf32> to vector<8x32xf32>
    %366 = vector.extract_strided_slice %347 {offsets = [0, 0], sizes = [8, 96], strides = [1, 1]} : vector<8x128xf32> to vector<8x96xf32>
    %367 = arith.negf %366 : vector<8x96xf32>
    %368 = math.exp %367 : vector<8x96xf32>
    %cst_102 = arith.constant 1.000000e+00 : f32
    %369 = vector.broadcast %cst_102 : f32 to vector<8x96xf32>
    %370 = arith.addf %369, %368 : vector<8x96xf32>
    %371 = arith.divf %369, %370 : vector<8x96xf32>
    %372 = vector.extract_strided_slice %347 {offsets = [0, 96], sizes = [8, 32], strides = [1, 1]} : vector<8x128xf32> to vector<8x32xf32>
    %373 = math.tanh %372 : vector<8x32xf32>
    %374 = vector.extract_strided_slice %371 {offsets = [0, 32], sizes = [8, 32], strides = [1, 1]} : vector<8x96xf32> to vector<8x32xf32>
    %375 = arith.mulf %374, %365 : vector<8x32xf32>
    %376 = vector.extract_strided_slice %371 {offsets = [0, 0], sizes = [8, 32], strides = [1, 1]} : vector<8x96xf32> to vector<8x32xf32>
    %377 = arith.mulf %376, %373 : vector<8x32xf32>
    %378 = arith.addf %375, %377 : vector<8x32xf32>
    %379 = vector.extract_strided_slice %371 {offsets = [0, 64], sizes = [8, 32], strides = [1, 1]} : vector<8x96xf32> to vector<8x32xf32>
    %380 = math.tanh %378 : vector<8x32xf32>
    %381 = arith.mulf %379, %380 : vector<8x32xf32>
    %c56_103 = arith.constant 56 : index
    %c0_104 = arith.constant 0 : index
    %382 = vector.load %arg6[%c56_103, %c0_104] : memref<64x64xf32, #tpu.memory_space<vmem>>, vector<8x32xf32>
    tpu.vector_store %arg6[%c56_103, %c0_104], %364 {strides = array<i32>} : memref<64x64xf32, #tpu.memory_space<vmem>>, vector<8x32xf32>,
    %c0_105 = arith.constant 0 : index
    %c32_106 = arith.constant 32 : index
    %383 = vector.load %arg6[%c0_105, %c32_106] : memref<64x64xf32, #tpu.memory_space<vmem>>, vector<8x32xf32>
    tpu.vector_store %arg6[%c0_105, %c32_106], %381 {strides = array<i32>} : memref<64x64xf32, #tpu.memory_space<vmem>>, vector<8x32xf32>,
    return
  }
}

</mosaic_0001>

<llo_original>
// kernel: tpu_custom_call.1
$region0: #{tpu_custom_call.1}
  #allocation0 [shape = 'u32[]', space=smem, size = 0x4, offset = 0x4, fixed_abs, tag = 'smem constant byte address 0x4 - core index']
  #allocation1 [shape = 'u32[144,128]{1,0:T(1,128)}', space=vmem, size = 0x12000, scoped, tag = 'internal scratch']
  #allocation2 [shape = 'f32[64,256]{1,0:T(8,128)}', space=vmem, size = 0x10000, scoped, tag = 'scratch operand']
  %s0 = inlined_call_operand.vmem [shape: f32[64,4], index: 0, kind: input, shape index: {}]
  %s1 = inlined_call_operand.hbm [shape: bf16[4,256], index: 1, kind: input, shape index: {}]
  %s2 = inlined_call_operand.vmem [shape: bf16[64,256], index: 2, kind: input, shape index: {}]
  %s3 = inlined_call_operand.vmem [shape: f32[1,256], index: 3, kind: input, shape index: {}]
  %s4 = inlined_call_operand.vmem [shape: f32[8,64], index: 4, kind: input, shape index: {}]
  %s5 = inlined_call_operand.vmem [shape: f32[8,64], index: 5, kind: input, shape index: {}]
  %s6 = inlined_call_operand.hbm [shape: f32[64,64], index: 6, kind: output, shape index: {}]
  %s7 = sld [smem:[#allocation0]]
  $region38: #{tpu_custom_call.1} parent=0
    _
  %s9 = ssub.s32 1, %s7
  %s10 = scalar_select 0, %s9, %s7
  $region1: #{tpu_custom_call.1} parent=0
    #allocation3 [shape = 'u8[2048]{0}', space=vmem, size = 0x800, scoped, tag = 'input window, operand 1, single buffered']
    #allocation4 [shape = 's32[1]{0}', space=sflag, size = 0x4, scoped, tag = 'scoped memory for tpu_custom_call.1']
    #allocation5 [shape = 's32[1]{0}', space=sflag, size = 0x4, scoped, tag = 'scoped memory for tpu_custom_call.1']
    #allocation6 [shape = 'u8[32768]{0}', space=vmem, size = 0x8000, scoped, tag = 'output window, operand 0, single buffered']
    %11 = vsyncpa [#allocation4], 0
    %12 = vsyncpa [#allocation5], 0
    // Predicated region
    $region2: #{tpu_custom_call.1} parent=1 // pred_check
      _
    $region3: #{tpu_custom_call.1} parent=1 // pred_check_branch
      %14 = sbr.rel (0) target = $region5
    $region4: #{tpu_custom_call.1} parent=1 // pred_region
      _
    $region5: #{tpu_custom_call.1} parent=1 // pred_fallthru
      _
    // Predicated region
    $region6: #{tpu_custom_call.1} parent=1 // pred_check
      _
    $region7: #{tpu_custom_call.1} parent=1 // pred_check_branch
      %16 = sbr.rel (0) target = $region9
    $region8: #{tpu_custom_call.1} parent=1 // pred_region
      %s18 = ssub.s32 64, 64
      %19 = vsyncadd [#allocation4], %s18
      %s21 = sshll.u32 [#allocation3], 4
      %s22 = int_to_ptr.vmem [resolvable:$true] %s21
      %24 = dma.hbm_to_vmem [thread:$0]  %s1, 64, %s22, [#allocation4]
    $region9: #{tpu_custom_call.1} parent=1 // pred_fallthru
      _
    // Predicated region
    $region10: #{tpu_custom_call.1} parent=1 // pred_check
      _
    $region11: #{tpu_custom_call.1} parent=1 // pred_check_branch
      %26 = sbr.rel (0) target = $region13
    $region12: #{tpu_custom_call.1} parent=1 // pred_region
      _
    $region13: #{tpu_custom_call.1} parent=1 // pred_fallthru
      _
    // Predicated region
    $region14: #{tpu_custom_call.1} parent=1 // pred_check
      _
    $region15: #{tpu_custom_call.1} parent=1 // pred_check_branch
      %28 = sbr.rel (0) target = $region17
    $region16: #{tpu_custom_call.1} parent=1 // pred_region
      _
    $region17: #{tpu_custom_call.1} parent=1 // pred_fallthru
      _
    // Predicated region
    $region18: #{tpu_custom_call.1} parent=1 // pred_check
      _
    $region19: #{tpu_custom_call.1} parent=1 // pred_check_branch
      %30 = sbr.rel (0) target = $region21
    $region20: #{tpu_custom_call.1} parent=1 // pred_region
      _
    $region21: #{tpu_custom_call.1} parent=1 // pred_fallthru
      _
    // Predicated region
    $region22: #{tpu_custom_call.1} parent=1 // pred_check
      _
    $region23: #{tpu_custom_call.1} parent=1 // pred_check_branch
      %32 = sbr.rel (0) target = $region25
    $region24: #{tpu_custom_call.1} parent=1 // pred_region
      _
    $region25: #{tpu_custom_call.1} parent=1 // pred_fallthru
      _
    // Predicated region
    $region26: #{tpu_custom_call.1} parent=1 // pred_check
      _
    $region27: #{tpu_custom_call.1} parent=1 // pred_check_branch
      %34 = sbr.rel (0) target = $region29
    $region28: #{tpu_custom_call.1} parent=1 // pred_region
      %35 = dma.done [#allocation4], 64
    $region29: #{tpu_custom_call.1} parent=1 // pred_fallthru
      _
    %v37 = vld [vmem:[%s0] sm:$0xff]
    %v38 = vld [vmem:[%s0 + $0x8] sm:$0xff]
    %v39 = vld [vmem:[%s0 + $0x10] sm:$0xff]
    %v40 = vld [vmem:[%s0 + $0x18] sm:$0xff]
    %v41 = vld [vmem:[%s0 + $0x20] sm:$0xff]
    %v42 = vld [vmem:[%s0 + $0x28] sm:$0xff]
    %v43 = vld [vmem:[%s0 + $0x30] sm:$0xff]
    %v44 = vld [vmem:[%s0 + $0x38] sm:$0xff]
    %v45 = vpack.c.bf16 %v38, %v37
    %v46 = vpack.c.bf16 %v40, %v39
    %v47 = vpack.c.bf16 %v42, %v41
    %v48 = vpack.c.bf16 %v44, %v43
    %v49 = vld [vmem:[#allocation3] sm:$0xf]
    %v50 = vld [vmem:[%s3] sm:$0x3]
    %v52 = vlaneseq
    %v53 = vshrl.u32 %v52, 7
    %v54 = vsub.s32 0, %v53
    %v55 = vrot.slane %v50, %v54
    %v56 = vlaneseq
    %v57 = vshrl.u32 %v56, 7
    %v58 = vsub.s32 1, %v57
    %v59 = vrot.slane %v50, %v58
    %v64 = vunpack.c.l.s4 1983009808
    %v65 = vunpack.c.0.s8 %v64
    %v66 = vlaneseq
    %v67 = vshrl.u32 %v66, 7
    %v68 = vsub.s32 %v65, %v67
    %v69 = vrot.slane %v49, %v68
    %v70 = vcombine.high %v69, %v69
    %vm71 = vcmask 31744
    %v73 = vsel %vm71, %v45, 0
    %v76 = vsel %vm71, %v46, 0
    %v79 = vsel %vm71, %v47, 0
    %v82 = vsel %vm71, %v48, 0
    %vm84 = vcmask 1041408
    %v86 = vsel %vm84, %v69, 0
    %v89 = vsel %vm84, %v70, 0
    %91 = vmatprep.subr.bf16.mxu0 %v89
    %92 = vmatpush1.bf16.msra.mxu0 %v86
    %93 = vmatprep.subr.bf16.mxu0 0
    %94 = vmatpush1.bf16.msra.mxu0 0
    %95 = vmatprep.subr.bf16.mxu0 0
    %96 = vmatpush1.bf16.msra.mxu0 0
    %97 = vmatprep.subr.bf16.mxu0 0
    %98 = vmatpush1.bf16.msra.mxu0 0
    %99 = vmatprep.subr.bf16.mxu0 0
    %100 = vmatpush1.bf16.msra.mxu0 0
    %101 = vmatprep.subr.bf16.mxu0 0
    %102 = vmatpush1.bf16.msra.mxu0 0
    %103 = vmatprep.subr.bf16.mxu0 0
    %104 = vmatpush1.bf16.msra.mxu0 0
    %105 = vmatprep.subr.bf16.mxu0 0
    %106 = vmatpush1.bf16.msra.mxu0 0
    %107 = vmatprep.subr.bf16.mxu0 0
    %108 = vmatpush1.bf16.msra.mxu0 0
    %109 = vmatprep.subr.bf16.mxu0 0
    %110 = vmatpush1.bf16.msra.mxu0 0
    %111 = vmatprep.subr.bf16.mxu0 0
    %112 = vmatpush1.bf16.msra.mxu0 0
    %113 = vmatprep.subr.bf16.mxu0 0
    %114 = vmatpush1.bf16.msra.mxu0 0
    %115 = vmatprep.subr.bf16.mxu0 0
    %116 = vmatpush1.bf16.msra.mxu0 0
    %117 = vmatprep.subr.bf16.mxu0 0
    %118 = vmatpush1.bf16.msra.mxu0 0
    %119 = vmatprep.subr.bf16.mxu0 0
    %120 = vmatpush1.bf16.msra.mxu0 0
    %121 = vmatprep.subr.bf16.mxu0 0
    %122 = vmatpush1.bf16.msra.mxu0 0
    %123 = vmatprep.mubr.bf16.mxu0 0
    %124 = vmatmul.mubr.bf16.gmra.mrb[0].mxu0 %v73
    %v125 = vpop.f32.mrb[0].mxu0
    %v126 = vadd.f32 %v55, %v125
    %v127 = vpop.f32.mrb[0].mxu0
    %v128 = vadd.f32 %v59, %v127
    %v129 = vpop.f32.mrb[0].mxu0
    %v130 = vadd.f32 %v55, %v129
    %v131 = vpop.f32.mrb[0].mxu0
    %v132 = vadd.f32 %v59, %v131
    %133 = vmatprep.mubr.bf16.mxu0 0
    %134 = vmatmul.mubr.bf16.gmra.mrb[0].mxu0 %v76
    %v135 = vpop.f32.mrb[0].mxu0
    %v136 = vadd.f32 %v55, %v135
    %v137 = vpop.f32.mrb[0].mxu0
    %v138 = vadd.f32 %v59, %v137
    %v139 = vpop.f32.mrb[0].mxu0
    %v140 = vadd.f32 %v55, %v139
    %v141 = vpop.f32.mrb[0].mxu0
    %v142 = vadd.f32 %v59, %v141
    %143 = vmatprep.mubr.bf16.mxu0 0
    %144 = vmatmul.mubr.bf16.gmra.mrb[0].mxu0 %v79
    %v145 = vpop.f32.mrb[0].mxu0
    %v146 = vadd.f32 %v55, %v145
    %v147 = vpop.f32.mrb[0].mxu0
    %v148 = vadd.f32 %v59, %v147
    %v149 = vpop.f32.mrb[0].mxu0
    %v150 = vadd.f32 %v55, %v149
    %v151 = vpop.f32.mrb[0].mxu0
    %v152 = vadd.f32 %v59, %v151
    %153 = vmatprep.mubr.bf16.mxu0 0
    %154 = vmatmul.mubr.bf16.gmra.mrb[0].mxu0 %v82
    %v155 = vpop.f32.mrb[0].mxu0
    %v156 = vadd.f32 %v55, %v155
    %v157 = vpop.f32.mrb[0].mxu0
    %v158 = vadd.f32 %v59, %v157
    %v159 = vpop.f32.mrb[0].mxu0
    %v160 = vadd.f32 %v55, %v159
    %v161 = vpop.f32.mrb[0].mxu0
    %v162 = vadd.f32 %v59, %v161
    %163 = vdwg.mxu0
    %164 = vst [vmem:[#allocation2] sm:$0xff] %v126
    %165 = vst [vmem:[#allocation2 + $0x8] sm:$0xff] %v128
    %166 = vst [vmem:[#allocation2 + $0x10] sm:$0xff] %v130
    %167 = vst [vmem:[#allocation2 + $0x18] sm:$0xff] %v132
    %168 = vst [vmem:[#allocation2 + $0x20] sm:$0xff] %v136
    %169 = vst [vmem:[#allocation2 + $0x28] sm:$0xff] %v138
    %170 = vst [vmem:[#allocation2 + $0x30] sm:$0xff] %v140
    %171 = vst [vmem:[#allocation2 + $0x38] sm:$0xff] %v142
    %172 = vst [vmem:[#allocation2 + $0x40] sm:$0xff] %v146
    %173 = vst [vmem:[#allocation2 + $0x48] sm:$0xff] %v148
    %174 = vst [vmem:[#allocation2 + $0x50] sm:$0xff] %v150
    %175 = vst [vmem:[#allocation2 + $0x58] sm:$0xff] %v152
    %176 = vst [vmem:[#allocation2 + $0x60] sm:$0xff] %v156
    %177 = vst [vmem:[#allocation2 + $0x68] sm:$0xff] %v158
    %178 = vst [vmem:[#allocation2 + $0x70] sm:$0xff] %v160
    %179 = vst [vmem:[#allocation2 + $0x78] sm:$0xff] %v162
    %v180 = vld [vmem:[%s4] sm:$0xff]
    %v181 = vld [vmem:[%s5] sm:$0xff]
    %v182 = vpack.c.bf16 %v180, %v180
    %v183 = vld [vmem:[%s2] sm:$0xff]
    %v184 = vld [vmem:[%s2 + $0x8] sm:$0xff]
    %v185 = vld [vmem:[%s2 + $0x10] sm:$0xff]
    %v186 = vld [vmem:[%s2 + $0x18] sm:$0xff]
    %v187 = vld [vmem:[%s2 + $0x20] sm:$0xff]
    %v188 = vld [vmem:[%s2 + $0x28] sm:$0xff]
    %v189 = vld [vmem:[%s2 + $0x30] sm:$0xff]
    %v190 = vld [vmem:[%s2 + $0x38] sm:$0xff]
    %v199 = vunpack.c.l.b16 %v183
    %v200 = vunpack.c.h.b16 %v183
    %v201 = vunpack.c.l.b16 %v184
    %v202 = vunpack.c.h.b16 %v184
    %v203 = vunpack.c.l.b16 %v185
    %v204 = vunpack.c.h.b16 %v185
    %v205 = vunpack.c.l.b16 %v186
    %v206 = vunpack.c.h.b16 %v186
    %v207 = vunpack.c.l.b16 %v187
    %v208 = vunpack.c.h.b16 %v187
    %v209 = vunpack.c.l.b16 %v188
    %v210 = vunpack.c.h.b16 %v188
    %v211 = vunpack.c.l.b16 %v189
    %v212 = vunpack.c.h.b16 %v189
    %v213 = vunpack.c.l.b16 %v190
    %v214 = vunpack.c.h.b16 %v190
    %v215 = vpack.c.b16 %v201, %v199
    %v216 = vpack.c.b16 %v202, %v200
    %v217 = vpack.c.b16 %v205, %v203
    %v218 = vpack.c.b16 %v206, %v204
    %v219 = vpack.c.b16 %v209, %v207
    %v220 = vpack.c.b16 %v210, %v208
    %v221 = vpack.c.b16 %v213, %v211
    %v222 = vpack.c.b16 %v214, %v212
    %vm231 = vcmask 523264
    %v233 = vsel %vm231, %v182, 0
    %235 = vmatprep.subr.bf16.mxu0 %v216
    %236 = vmatpush1.bf16.msra.mxu0 %v215
    %237 = vmatprep.subr.bf16.mxu0 %v218
    %238 = vmatpush1.bf16.msra.mxu0 %v217
    %239 = vmatprep.subr.bf16.mxu0 %v220
    %240 = vmatpush1.bf16.msra.mxu0 %v219
    %241 = vmatprep.subr.bf16.mxu0 %v222
    %242 = vmatpush1.bf16.msra.mxu0 %v221
    %243 = vmatprep.subr.bf16.mxu0 0
    %244 = vmatpush1.bf16.msra.mxu0 0
    %245 = vmatprep.subr.bf16.mxu0 0
    %246 = vmatpush1.bf16.msra.mxu0 0
    %247 = vmatprep.subr.bf16.mxu0 0
    %248 = vmatpush1.bf16.msra.mxu0 0
    %249 = vmatprep.subr.bf16.mxu0 0
    %250 = vmatpush1.bf16.msra.mxu0 0
    %251 = vmatprep.subr.bf16.mxu0 0
    %252 = vmatpush1.bf16.msra.mxu0 0
    %253 = vmatprep.subr.bf16.mxu0 0
    %254 = vmatpush1.bf16.msra.mxu0 0
    %255 = vmatprep.subr.bf16.mxu0 0
    %256 = vmatpush1.bf16.msra.mxu0 0
    %257 = vmatprep.subr.bf16.mxu0 0
    %258 = vmatpush1.bf16.msra.mxu0 0
    %259 = vmatprep.subr.bf16.mxu0 0
    %260 = vmatpush1.bf16.msra.mxu0 0
    %261 = vmatprep.subr.bf16.mxu0 0
    %262 = vmatpush1.bf16.msra.mxu0 0
    %263 = vmatprep.subr.bf16.mxu0 0
    %264 = vmatpush1.bf16.msra.mxu0 0
    %265 = vmatprep.subr.bf16.mxu0 0
    %266 = vmatpush1.bf16.msra.mxu0 0
    %267 = vmatprep.mubr.bf16.mxu0 0
    %268 = vmatmul.mubr.bf16.gmra.mrb[0].mxu0 %v233
    %v269 = vpop.f32.mrb[0].mxu0
    %v270 = vadd.f32 0.0, %v269
    %v271 = vpop.f32.mrb[0].mxu0
    %v272 = vadd.f32 0.0, %v271
    %v273 = vpop.f32.mrb[0].mxu0
    %v274 = vpop.f32.mrb[0].mxu0
    %275 = vdwg.mxu0
    %v276 = vld [vmem:[#allocation2] sm:$0xff]
    %v277 = vadd.f32 %v276, %v270
    %v278 = vld [vmem:[#allocation2 + $0x78] sm:$0xff]
    %v279 = vadd.f32 %v278, %v272
    %v280 = vxor.u32 %v277, 2147483648
    %v281 = vmul.f32 %v280, 1.442695
    %v282 = vpow.pop %v281
    %v283 = vadd.f32 %v282, 1.0
    %v284 = vrcp.pop %v283
    %v285 = vmul.f32 1.0, %v284
    %v286 = vtanh.pop %v277
    %288 = vrot.lane.b32.xlu0 %v181, 32
    %v289 = vpop.permute.xlu0 %288
    %v291 = vmul.f32 %v285, %v289
    %293 = vrot.lane.b32.xlu0 %v286, 32
    %v294 = vpop.permute.xlu0 %293
    %v296 = vmul.f32 %v285, %v294
    %298 = vrot.lane.b32.xlu0 %v296, 32
    %v299 = vpop.permute.xlu0 %298
    %v301 = vadd.f32 %v291, %v299
    %v302 = vtanh.pop %v301
    %304 = vrot.lane.b32.xlu0 %v302, 32
    %v305 = vpop.permute.xlu0 %304
    %v307 = vmul.f32 %v285, %v305
    %v308 = vxor.u32 %v279, 2147483648
    %v309 = vmul.f32 %v308, 1.442695
    %v310 = vpow.pop %v309
    %v311 = vadd.f32 %v310, 1.0
    %v312 = vrcp.pop %v311
    %v313 = vmul.f32 1.0, %v312
    %v314 = vtanh.pop %v279
    %v315 = vmul.f32 %v313, %v181
    %317 = vrot.lane.b32.xlu0 %v314, 32
    %v318 = vpop.permute.xlu0 %317
    %v320 = vmul.f32 %v313, %v318
    %322 = vrot.lane.b32.xlu0 %v320, 32
    %v323 = vpop.permute.xlu0 %322
    %v325 = vadd.f32 %v315, %v323
    %v326 = vtanh.pop %v325
    %328 = vrot.lane.b32.xlu0 %v326, 32
    %v329 = vpop.permute.xlu0 %328
    %v331 = vmul.f32 %v313, %v329
    %333 = vrot.lane.b32.xlu0 %v307, 64
    %v334 = vpop.permute.xlu0 %333
    %337 = vrot.lane.b32.xlu0 %v331, 96
    %v338 = vpop.permute.xlu0 %337
    %vm340 = vcmask 261120
    %v341 = vsel %vm340, %v334, %v338
    %343 = vrot.lane.b32.xlu0 %v301, 96
    %v344 = vpop.permute.xlu0 %343
    %v346 = vsel %vm340, %v344, %v325
    %347 = vst.msk [vmem:[#allocation6] sm:$0xff] %vm340, %v334
    %vm348 = vcmask 523520
    %349 = vst.msk [vmem:[#allocation6 + $0x38] sm:$0xff] %vm348, %v338
    %v350 = vpack.c.bf16 %v341, %v341
    %v351 = vld [vmem:[%s2] sm:$0xff]
    %v352 = vld [vmem:[%s2 + $0x8] sm:$0xff]
    %v353 = vld [vmem:[%s2 + $0x10] sm:$0xff]
    %v354 = vld [vmem:[%s2 + $0x18] sm:$0xff]
    %v355 = vld [vmem:[%s2 + $0x20] sm:$0xff]
    %v356 = vld [vmem:[%s2 + $0x28] sm:$0xff]
    %v357 = vld [vmem:[%s2 + $0x30] sm:$0xff]
    %v358 = vld [vmem:[%s2 + $0x38] sm:$0xff]
    %v367 = vunpack.c.l.b16 %v351
    %v368 = vunpack.c.h.b16 %v351
    %v369 = vunpack.c.l.b16 %v352
    %v370 = vunpack.c.h.b16 %v352
    %v371 = vunpack.c.l.b16 %v353
    %v372 = vunpack.c.h.b16 %v353
    %v373 = vunpack.c.l.b16 %v354
    %v374 = vunpack.c.h.b16 %v354
    %v375 = vunpack.c.l.b16 %v355
    %v376 = vunpack.c.h.b16 %v355
    %v377 = vunpack.c.l.b16 %v356
    %v378 = vunpack.c.h.b16 %v356
    %v379 = vunpack.c.l.b16 %v357
    %v380 = vunpack.c.h.b16 %v357
    %v381 = vunpack.c.l.b16 %v358
    %v382 = vunpack.c.h.b16 %v358
    %v383 = vpack.c.b16 %v369, %v367
    %v384 = vpack.c.b16 %v370, %v368
    %v385 = vpack.c.b16 %v373, %v371
    %v386 = vpack.c.b16 %v374, %v372
    %v387 = vpack.c.b16 %v377, %v375
    %v388 = vpack.c.b16 %v378, %v376
    %v389 = vpack.c.b16 %v381, %v379
    %v390 = vpack.c.b16 %v382, %v380
    %v400 = vsel %vm231, %v350, 0
    %402 = vmatprep.subr.bf16.mxu0 %v384
    %403 = vmatpush1.bf16.msra.mxu0 %v383
    %404 = vmatprep.subr.bf16.mxu0 %v386
    %405 = vmatpush1.bf16.msra.mxu0 %v385
    %406 = vmatprep.subr.bf16.mxu0 %v388
    %407 = vmatpush1.bf16.msra.mxu0 %v387
    %408 = vmatprep.subr.bf16.mxu0 %v390
    %409 = vmatpush1.bf16.msra.mxu0 %v389
    %410 = vmatprep.subr.bf16.mxu0 0
    %411 = vmatpush1.bf16.msra.mxu0 0
    %412 = vmatprep.subr.bf16.mxu0 0
    %413 = vmatpush1.bf16.msra.mxu0 0
    %414 = vmatprep.subr.bf16.mxu0 0
    %415 = vmatpush1.bf16.msra.mxu0 0
    %416 = vmatprep.subr.bf16.mxu0 0
    %417 = vmatpush1.bf16.msra.mxu0 0
    %418 = vmatprep.subr.bf16.mxu0 0
    %419 = vmatpush1.bf16.msra.mxu0 0
    %420 = vmatprep.subr.bf16.mxu0 0
    %421 = vmatpush1.bf16.msra.mxu0 0
    %422 = vmatprep.subr.bf16.mxu0 0
    %423 = vmatpush1.bf16.msra.mxu0 0
    %424 = vmatprep.subr.bf16.mxu0 0
    %425 = vmatpush1.bf16.msra.mxu0 0
    %426 = vmatprep.subr.bf16.mxu0 0
    %427 = vmatpush1.bf16.msra.mxu0 0
    %428 = vmatprep.subr.bf16.mxu0 0
    %429 = vmatpush1.bf16.msra.mxu0 0
    %430 = vmatprep.subr.bf16.mxu0 0
    %431 = vmatpush1.bf16.msra.mxu0 0
    %432 = vmatprep.subr.bf16.mxu0 0
    %433 = vmatpush1.bf16.msra.mxu0 0
    %434 = vmatprep.mubr.bf16.mxu0 0
    %435 = vmatmul.mubr.bf16.gmra.mrb[0].mxu0 %v400
    %v436 = vpop.f32.mrb[0].mxu0
    %v437 = vadd.f32 0.0, %v436
    %v438 = vpop.f32.mrb[0].mxu0
    %v439 = vadd.f32 0.0, %v438
    %v440 = vpop.f32.mrb[0].mxu0
    %v441 = vpop.f32.mrb[0].mxu0
    %442 = vdwg.mxu0
    %v443 = vld [vmem:[#allocation2 + $0x10] sm:$0xff]
    %v444 = vadd.f32 %v443, %v437
    %v445 = vld [vmem:[#allocation2 + $0x68] sm:$0xff]
    %v446 = vadd.f32 %v445, %v439
    %v447 = vxor.u32 %v444, 2147483648
    %v448 = vmul.f32 %v447, 1.442695
    %v449 = vpow.pop %v448
    %v450 = vadd.f32 %v449, 1.0
    %v451 = vrcp.pop %v450
    %v452 = vmul.f32 1.0, %v451
    %v453 = vtanh.pop %v444
    %455 = vrot.lane.b32.xlu0 %v346, 32
    %v456 = vpop.permute.xlu0 %455
    %v458 = vmul.f32 %v452, %v456
    %460 = vrot.lane.b32.xlu0 %v453, 32
    %v461 = vpop.permute.xlu0 %460
    %v463 = vmul.f32 %v452, %v461
    %465 = vrot.lane.b32.xlu0 %v463, 32
    %v466 = vpop.permute.xlu0 %465
    %v468 = vadd.f32 %v458, %v466
    %v469 = vtanh.pop %v468
    %471 = vrot.lane.b32.xlu0 %v469, 32
    %v472 = vpop.permute.xlu0 %471
    %v474 = vmul.f32 %v452, %v472
    %v475 = vxor.u32 %v446, 2147483648
    %v476 = vmul.f32 %v475, 1.442695
    %v477 = vpow.pop %v476
    %v478 = vadd.f32 %v477, 1.0
    %v479 = vrcp.pop %v478
    %v480 = vmul.f32 1.0, %v479
    %v481 = vtanh.pop %v446
    %v482 = vmul.f32 %v480, %v346
    %484 = vrot.lane.b32.xlu0 %v481, 32
    %v485 = vpop.permute.xlu0 %484
    %v487 = vmul.f32 %v480, %v485
    %489 = vrot.lane.b32.xlu0 %v487, 32
    %v490 = vpop.permute.xlu0 %489
    %v492 = vadd.f32 %v482, %v490
    %v493 = vtanh.pop %v492
    %495 = vrot.lane.b32.xlu0 %v493, 32
    %v496 = vpop.permute.xlu0 %495
    %v498 = vmul.f32 %v480, %v496
    %500 = vrot.lane.b32.xlu0 %v474, 64
    %v501 = vpop.permute.xlu0 %500
    %504 = vrot.lane.b32.xlu0 %v498, 96
    %v505 = vpop.permute.xlu0 %504
    %v507 = vsel %vm340, %v501, %v505
    %509 = vrot.lane.b32.xlu0 %v468, 96
    %v510 = vpop.permute.xlu0 %509
    %v512 = vsel %vm340, %v510, %v492
    %513 = vst.msk [vmem:[#allocation6 + $0x8] sm:$0xff] %vm340, %v501
    %514 = vst.msk [vmem:[#allocation6 + $0x30] sm:$0xff] %vm348, %v505
    %v515 = vpack.c.bf16 %v507, %v507
    %v516 = vld [vmem:[%s2] sm:$0xff]
    %v517 = vld [vmem:[%s2 + $0x8] sm:$0xff]
    %v518 = vld [vmem:[%s2 + $0x10] sm:$0xff]
    %v519 = vld [vmem:[%s2 + $0x18] sm:$0xff]
    %v520 = vld [vmem:[%s2 + $0x20] sm:$0xff]
    %v521 = vld [vmem:[%s2 + $0x28] sm:$0xff]
    %v522 = vld [vmem:[%s2 + $0x30] sm:$0xff]
    %v523 = vld [vmem:[%s2 + $0x38] sm:$0xff]
    %v532 = vunpack.c.l.b16 %v516
    %v533 = vunpack.c.h.b16 %v516
    %v534 = vunpack.c.l.b16 %v517
    %v535 = vunpack.c.h.b16 %v517
    %v536 = vunpack.c.l.b16 %v518
    %v537 = vunpack.c.h.b16 %v518
    %v538 = vunpack.c.l.b16 %v519
    %v539 = vunpack.c.h.b16 %v519
    %v540 = vunpack.c.l.b16 %v520
    %v541 = vunpack.c.h.b16 %v520
    %v542 = vunpack.c.l.b16 %v521
    %v543 = vunpack.c.h.b16 %v521
    %v544 = vunpack.c.l.b16 %v522
    %v545 = vunpack.c.h.b16 %v522
    %v546 = vunpack.c.l.b16 %v523
    %v547 = vunpack.c.h.b16 %v523
    %v548 = vpack.c.b16 %v534, %v532
    %v549 = vpack.c.b16 %v535, %v533
    %v550 = vpack.c.b16 %v538, %v536
    %v551 = vpack.c.b16 %v539, %v537
    %v552 = vpack.c.b16 %v542, %v540
    %v553 = vpack.c.b16 %v543, %v541
    %v554 = vpack.c.b16 %v546, %v544
    %v555 = vpack.c.b16 %v547, %v545
    %v565 = vsel %vm231, %v515, 0
    %567 = vmatprep.subr.bf16.mxu0 %v549
    %568 = vmatpush1.bf16.msra.mxu0 %v548
    %569 = vmatprep.subr.bf16.mxu0 %v551
    %570 = vmatpush1.bf16.msra.mxu0 %v550
    %571 = vmatprep.subr.bf16.mxu0 %v553
    %572 = vmatpush1.bf16.msra.mxu0 %v552
    %573 = vmatprep.subr.bf16.mxu0 %v555
    %574 = vmatpush1.bf16.msra.mxu0 %v554
    %575 = vmatprep.subr.bf16.mxu0 0
    %576 = vmatpush1.bf16.msra.mxu0 0
    %577 = vmatprep.subr.bf16.mxu0 0
    %578 = vmatpush1.bf16.msra.mxu0 0
    %579 = vmatprep.subr.bf16.mxu0 0
    %580 = vmatpush1.bf16.msra.mxu0 0
    %581 = vmatprep.subr.bf16.mxu0 0
    %582 = vmatpush1.bf16.msra.mxu0 0
    %583 = vmatprep.subr.bf16.mxu0 0
    %584 = vmatpush1.bf16.msra.mxu0 0
    %585 = vmatprep.subr.bf16.mxu0 0
    %586 = vmatpush1.bf16.msra.mxu0 0
    %587 = vmatprep.subr.bf16.mxu0 0
    %588 = vmatpush1.bf16.msra.mxu0 0
    %589 = vmatprep.subr.bf16.mxu0 0
    %590 = vmatpush1.bf16.msra.mxu0 0
    %591 = vmatprep.subr.bf16.mxu0 0
    %592 = vmatpush1.bf16.msra.mxu0 0
    %593 = vmatprep.subr.bf16.mxu0 0
    %594 = vmatpush1.bf16.msra.mxu0 0
    %595 = vmatprep.subr.bf16.mxu0 0
    %596 = vmatpush1.bf16.msra.mxu0 0
    %597 = vmatprep.subr.bf16.mxu0 0
    %598 = vmatpush1.bf16.msra.mxu0 0
    %599 = vmatprep.mubr.bf16.mxu0 0
    %600 = vmatmul.mubr.bf16.gmra.mrb[0].mxu0 %v565
    %v601 = vpop.f32.mrb[0].mxu0
    %v602 = vadd.f32 0.0, %v601
    %v603 = vpop.f32.mrb[0].mxu0
    %v604 = vadd.f32 0.0, %v603
    %v605 = vpop.f32.mrb[0].mxu0
    %v606 = vpop.f32.mrb[0].mxu0
    %607 = vdwg.mxu0
    %v608 = vld [vmem:[#allocation2 + $0x20] sm:$0xff]
    %v609 = vadd.f32 %v608, %v602
    %v610 = vld [vmem:[#allocation2 + $0x58] sm:$0xff]
    %v611 = vadd.f32 %v610, %v604
    %v612 = vxor.u32 %v609, 2147483648
    %v613 = vmul.f32 %v612, 1.442695
    %v614 = vpow.pop %v613
    %v615 = vadd.f32 %v614, 1.0
    %v616 = vrcp.pop %v615
    %v617 = vmul.f32 1.0, %v616
    %v618 = vtanh.pop %v609
    %620 = vrot.lane.b32.xlu0 %v512, 32
    %v621 = vpop.permute.xlu0 %620
    %v623 = vmul.f32 %v617, %v621
    %625 = vrot.lane.b32.xlu0 %v618, 32
    %v626 = vpop.permute.xlu0 %625
    %v628 = vmul.f32 %v617, %v626
    %630 = vrot.lane.b32.xlu0 %v628, 32
    %v631 = vpop.permute.xlu0 %630
    %v633 = vadd.f32 %v623, %v631
    %v634 = vtanh.pop %v633
    %636 = vrot.lane.b32.xlu0 %v634, 32
    %v637 = vpop.permute.xlu0 %636
    %v639 = vmul.f32 %v617, %v637
    %v640 = vxor.u32 %v611, 2147483648
    %v641 = vmul.f32 %v640, 1.442695
    %v642 = vpow.pop %v641
    %v643 = vadd.f32 %v642, 1.0
    %v644 = vrcp.pop %v643
    %v645 = vmul.f32 1.0, %v644
    %v646 = vtanh.pop %v611
    %v647 = vmul.f32 %v645, %v512
    %649 = vrot.lane.b32.xlu0 %v646, 32
    %v650 = vpop.permute.xlu0 %649
    %v652 = vmul.f32 %v645, %v650
    %654 = vrot.lane.b32.xlu0 %v652, 32
    %v655 = vpop.permute.xlu0 %654
    %v657 = vadd.f32 %v647, %v655
    %v658 = vtanh.pop %v657
    %660 = vrot.lane.b32.xlu0 %v658, 32
    %v661 = vpop.permute.xlu0 %660
    %v663 = vmul.f32 %v645, %v661
    %665 = vrot.lane.b32.xlu0 %v639, 64
    %v666 = vpop.permute.xlu0 %665
    %669 = vrot.lane.b32.xlu0 %v663, 96
    %v670 = vpop.permute.xlu0 %669
    %v672 = vsel %vm340, %v666, %v670
    %674 = vrot.lane.b32.xlu0 %v633, 96
    %v675 = vpop.permute.xlu0 %674
    %v677 = vsel %vm340, %v675, %v657
    %678 = vst.msk [vmem:[#allocation6 + $0x10] sm:$0xff] %vm340, %v666
    %679 = vst.msk [vmem:[#allocation6 + $0x28] sm:$0xff] %vm348, %v670
    %v680 = vpack.c.bf16 %v672, %v672
    %v681 = vld [vmem:[%s2] sm:$0xff]
    %v682 = vld [vmem:[%s2 + $0x8] sm:$0xff]
    %v683 = vld [vmem:[%s2 + $0x10] sm:$0xff]
    %v684 = vld [vmem:[%s2 + $0x18] sm:$0xff]
    %v685 = vld [vmem:[%s2 + $0x20] sm:$0xff]
    %v686 = vld [vmem:[%s2 + $0x28] sm:$0xff]
    %v687 = vld [vmem:[%s2 + $0x30] sm:$0xff]
    %v688 = vld [vmem:[%s2 + $0x38] sm:$0xff]
    %v697 = vunpack.c.l.b16 %v681
    %v698 = vunpack.c.h.b16 %v681
    %v699 = vunpack.c.l.b16 %v682
    %v700 = vunpack.c.h.b16 %v682
    %v701 = vunpack.c.l.b16 %v683
    %v702 = vunpack.c.h.b16 %v683
    %v703 = vunpack.c.l.b16 %v684
    %v704 = vunpack.c.h.b16 %v684
    %v705 = vunpack.c.l.b16 %v685
    %v706 = vunpack.c.h.b16 %v685
    %v707 = vunpack.c.l.b16 %v686
    %v708 = vunpack.c.h.b16 %v686
    %v709 = vunpack.c.l.b16 %v687
    %v710 = vunpack.c.h.b16 %v687
    %v711 = vunpack.c.l.b16 %v688
    %v712 = vunpack.c.h.b16 %v688
    %v713 = vpack.c.b16 %v699, %v697
    %v714 = vpack.c.b16 %v700, %v698
    %v715 = vpack.c.b16 %v703, %v701
    %v716 = vpack.c.b16 %v704, %v702
    %v717 = vpack.c.b16 %v707, %v705
    %v718 = vpack.c.b16 %v708, %v706
    %v719 = vpack.c.b16 %v711, %v709
    %v720 = vpack.c.b16 %v712, %v710
    %v730 = vsel %vm231, %v680, 0
    %732 = vmatprep.subr.bf16.mxu0 %v714
    %733 = vmatpush1.bf16.msra.mxu0 %v713
    %734 = vmatprep.subr.bf16.mxu0 %v716
    %735 = vmatpush1.bf16.msra.mxu0 %v715
    %736 = vmatprep.subr.bf16.mxu0 %v718
    %737 = vmatpush1.bf16.msra.mxu0 %v717
    %738 = vmatprep.subr.bf16.mxu0 %v720
    %739 = vmatpush1.bf16.msra.mxu0 %v719
    %740 = vmatprep.subr.bf16.mxu0 0
    %741 = vmatpush1.bf16.msra.mxu0 0
    %742 = vmatprep.subr.bf16.mxu0 0
    %743 = vmatpush1.bf16.msra.mxu0 0
    %744 = vmatprep.subr.bf16.mxu0 0
    %745 = vmatpush1.bf16.msra.mxu0 0
    %746 = vmatprep.subr.bf16.mxu0 0
    %747 = vmatpush1.bf16.msra.mxu0 0
    %748 = vmatprep.subr.bf16.mxu0 0
    %749 = vmatpush1.bf16.msra.mxu0 0
    %750 = vmatprep.subr.bf16.mxu0 0
    %751 = vmatpush1.bf16.msra.mxu0 0
    %752 = vmatprep.subr.bf16.mxu0 0
    %753 = vmatpush1.bf16.msra.mxu0 0
    %754 = vmatprep.subr.bf16.mxu0 0
    %755 = vmatpush1.bf16.msra.mxu0 0
    %756 = vmatprep.subr.bf16.mxu0 0
    %757 = vmatpush1.bf16.msra.mxu0 0
    %758 = vmatprep.subr.bf16.mxu0 0
    %759 = vmatpush1.bf16.msra.mxu0 0
    %760 = vmatprep.subr.bf16.mxu0 0
    %761 = vmatpush1.bf16.msra.mxu0 0
    %762 = vmatprep.subr.bf16.mxu0 0
    %763 = vmatpush1.bf16.msra.mxu0 0
    %764 = vmatprep.mubr.bf16.mxu0 0
    %765 = vmatmul.mubr.bf16.gmra.mrb[0].mxu0 %v730
    %v766 = vpop.f32.mrb[0].mxu0
    %v767 = vadd.f32 0.0, %v766
    %v768 = vpop.f32.mrb[0].mxu0
    %v769 = vadd.f32 0.0, %v768
    %v770 = vpop.f32.mrb[0].mxu0
    %v771 = vpop.f32.mrb[0].mxu0
    %772 = vdwg.mxu0
    %v773 = vld [vmem:[#allocation2 + $0x30] sm:$0xff]
    %v774 = vadd.f32 %v773, %v767
    %v775 = vld [vmem:[#allocation2 + $0x48] sm:$0xff]
    %v776 = vadd.f32 %v775, %v769
    %v777 = vxor.u32 %v774, 2147483648
    %v778 = vmul.f32 %v777, 1.442695
    %v779 = vpow.pop %v778
    %v780 = vadd.f32 %v779, 1.0
    %v781 = vrcp.pop %v780
    %v782 = vmul.f32 1.0, %v781
    %v783 = vtanh.pop %v774
    %785 = vrot.lane.b32.xlu0 %v677, 32
    %v786 = vpop.permute.xlu0 %785
    %v788 = vmul.f32 %v782, %v786
    %790 = vrot.lane.b32.xlu0 %v783, 32
    %v791 = vpop.permute.xlu0 %790
    %v793 = vmul.f32 %v782, %v791
    %795 = vrot.lane.b32.xlu0 %v793, 32
    %v796 = vpop.permute.xlu0 %795
    %v798 = vadd.f32 %v788, %v796
    %v799 = vtanh.pop %v798
    %801 = vrot.lane.b32.xlu0 %v799, 32
    %v802 = vpop.permute.xlu0 %801
    %v804 = vmul.f32 %v782, %v802
    %v805 = vxor.u32 %v776, 2147483648
    %v806 = vmul.f32 %v805, 1.442695
    %v807 = vpow.pop %v806
    %v808 = vadd.f32 %v807, 1.0
    %v809 = vrcp.pop %v808
    %v810 = vmul.f32 1.0, %v809
    %v811 = vtanh.pop %v776
    %v812 = vmul.f32 %v810, %v677
    %814 = vrot.lane.b32.xlu0 %v811, 32
    %v815 = vpop.permute.xlu0 %814
    %v817 = vmul.f32 %v810, %v815
    %819 = vrot.lane.b32.xlu0 %v817, 32
    %v820 = vpop.permute.xlu0 %819
    %v822 = vadd.f32 %v812, %v820
    %v823 = vtanh.pop %v822
    %825 = vrot.lane.b32.xlu0 %v823, 32
    %v826 = vpop.permute.xlu0 %825
    %v828 = vmul.f32 %v810, %v826
    %830 = vrot.lane.b32.xlu0 %v804, 64
    %v831 = vpop.permute.xlu0 %830
    %834 = vrot.lane.b32.xlu0 %v828, 96
    %v835 = vpop.permute.xlu0 %834
    %v837 = vsel %vm340, %v831, %v835
    %839 = vrot.lane.b32.xlu0 %v798, 96
    %v840 = vpop.permute.xlu0 %839
    %v842 = vsel %vm340, %v840, %v822
    %843 = vst.msk [vmem:[#allocation6 + $0x18] sm:$0xff] %vm340, %v831
    %844 = vst.msk [vmem:[#allocation6 + $0x20] sm:$0xff] %vm348, %v835
    %v845 = vpack.c.bf16 %v837, %v837
    %v846 = vld [vmem:[%s2] sm:$0xff]
    %v847 = vld [vmem:[%s2 + $0x8] sm:$0xff]
    %v848 = vld [vmem:[%s2 + $0x10] sm:$0xff]
    %v849 = vld [vmem:[%s2 + $0x18] sm:$0xff]
    %v850 = vld [vmem:[%s2 + $0x20] sm:$0xff]
    %v851 = vld [vmem:[%s2 + $0x28] sm:$0xff]
    %v852 = vld [vmem:[%s2 + $0x30] sm:$0xff]
    %v853 = vld [vmem:[%s2 + $0x38] sm:$0xff]
    %v862 = vunpack.c.l.b16 %v846
    %v863 = vunpack.c.h.b16 %v846
    %v864 = vunpack.c.l.b16 %v847
    %v865 = vunpack.c.h.b16 %v847
    %v866 = vunpack.c.l.b16 %v848
    %v867 = vunpack.c.h.b16 %v848
    %v868 = vunpack.c.l.b16 %v849
    %v869 = vunpack.c.h.b16 %v849
    %v870 = vunpack.c.l.b16 %v850
    %v871 = vunpack.c.h.b16 %v850
    %v872 = vunpack.c.l.b16 %v851
    %v873 = vunpack.c.h.b16 %v851
    %v874 = vunpack.c.l.b16 %v852
    %v875 = vunpack.c.h.b16 %v852
    %v876 = vunpack.c.l.b16 %v853
    %v877 = vunpack.c.h.b16 %v853
    %v878 = vpack.c.b16 %v864, %v862
    %v879 = vpack.c.b16 %v865, %v863
    %v880 = vpack.c.b16 %v868, %v866
    %v881 = vpack.c.b16 %v869, %v867
    %v882 = vpack.c.b16 %v872, %v870
    %v883 = vpack.c.b16 %v873, %v871
    %v884 = vpack.c.b16 %v876, %v874
    %v885 = vpack.c.b16 %v877, %v875
    %v895 = vsel %vm231, %v845, 0
    %897 = vmatprep.subr.bf16.mxu0 %v879
    %898 = vmatpush1.bf16.msra.mxu0 %v878
    %899 = vmatprep.subr.bf16.mxu0 %v881
    %900 = vmatpush1.bf16.msra.mxu0 %v880
    %901 = vmatprep.subr.bf16.mxu0 %v883
    %902 = vmatpush1.bf16.msra.mxu0 %v882
    %903 = vmatprep.subr.bf16.mxu0 %v885
    %904 = vmatpush1.bf16.msra.mxu0 %v884
    %905 = vmatprep.subr.bf16.mxu0 0
    %906 = vmatpush1.bf16.msra.mxu0 0
    %907 = vmatprep.subr.bf16.mxu0 0
    %908 = vmatpush1.bf16.msra.mxu0 0
    %909 = vmatprep.subr.bf16.mxu0 0
    %910 = vmatpush1.bf16.msra.mxu0 0
    %911 = vmatprep.subr.bf16.mxu0 0
    %912 = vmatpush1.bf16.msra.mxu0 0
    %913 = vmatprep.subr.bf16.mxu0 0
    %914 = vmatpush1.bf16.msra.mxu0 0
    %915 = vmatprep.subr.bf16.mxu0 0
    %916 = vmatpush1.bf16.msra.mxu0 0
    %917 = vmatprep.subr.bf16.mxu0 0
    %918 = vmatpush1.bf16.msra.mxu0 0
    %919 = vmatprep.subr.bf16.mxu0 0
    %920 = vmatpush1.bf16.msra.mxu0 0
    %921 = vmatprep.subr.bf16.mxu0 0
    %922 = vmatpush1.bf16.msra.mxu0 0
    %923 = vmatprep.subr.bf16.mxu0 0
    %924 = vmatpush1.bf16.msra.mxu0 0
    %925 = vmatprep.subr.bf16.mxu0 0
    %926 = vmatpush1.bf16.msra.mxu0 0
    %927 = vmatprep.subr.bf16.mxu0 0
    %928 = vmatpush1.bf16.msra.mxu0 0
    %929 = vmatprep.mubr.bf16.mxu0 0
    %930 = vmatmul.mubr.bf16.gmra.mrb[0].mxu0 %v895
    %v931 = vpop.f32.mrb[0].mxu0
    %v932 = vadd.f32 0.0, %v931
    %v933 = vpop.f32.mrb[0].mxu0
    %v934 = vadd.f32 0.0, %v933
    %v935 = vpop.f32.mrb[0].mxu0
    %v936 = vpop.f32.mrb[0].mxu0
    %937 = vdwg.mxu0
    %v938 = vld [vmem:[#allocation2 + $0x40] sm:$0xff]
    %v939 = vadd.f32 %v938, %v932
    %v940 = vld [vmem:[#allocation2 + $0x38] sm:$0xff]
    %v941 = vadd.f32 %v940, %v934
    %v942 = vxor.u32 %v939, 2147483648
    %v943 = vmul.f32 %v942, 1.442695
    %v944 = vpow.pop %v943
    %v945 = vadd.f32 %v944, 1.0
    %v946 = vrcp.pop %v945
    %v947 = vmul.f32 1.0, %v946
    %v948 = vtanh.pop %v939
    %950 = vrot.lane.b32.xlu0 %v842, 32
    %v951 = vpop.permute.xlu0 %950
    %v953 = vmul.f32 %v947, %v951
    %955 = vrot.lane.b32.xlu0 %v948, 32
    %v956 = vpop.permute.xlu0 %955
    %v958 = vmul.f32 %v947, %v956
    %960 = vrot.lane.b32.xlu0 %v958, 32
    %v961 = vpop.permute.xlu0 %960
    %v963 = vadd.f32 %v953, %v961
    %v964 = vtanh.pop %v963
    %966 = vrot.lane.b32.xlu0 %v964, 32
    %v967 = vpop.permute.xlu0 %966
    %v969 = vmul.f32 %v947, %v967
    %v970 = vxor.u32 %v941, 2147483648
    %v971 = vmul.f32 %v970, 1.442695
    %v972 = vpow.pop %v971
    %v973 = vadd.f32 %v972, 1.0
    %v974 = vrcp.pop %v973
    %v975 = vmul.f32 1.0, %v974
    %v976 = vtanh.pop %v941
    %v977 = vmul.f32 %v975, %v842
    %979 = vrot.lane.b32.xlu0 %v976, 32
    %v980 = vpop.permute.xlu0 %979
    %v982 = vmul.f32 %v975, %v980
    %984 = vrot.lane.b32.xlu0 %v982, 32
    %v985 = vpop.permute.xlu0 %984
    %v987 = vadd.f32 %v977, %v985
    %v988 = vtanh.pop %v987
    %990 = vrot.lane.b32.xlu0 %v988, 32
    %v991 = vpop.permute.xlu0 %990
    %v993 = vmul.f32 %v975, %v991
    %995 = vrot.lane.b32.xlu0 %v969, 64
    %v996 = vpop.permute.xlu0 %995
    %999 = vrot.lane.b32.xlu0 %v993, 96
    %v1000 = vpop.permute.xlu0 %999
    %v1002 = vsel %vm340, %v996, %v1000
    %1004 = vrot.lane.b32.xlu0 %v963, 96
    %v1005 = vpop.permute.xlu0 %1004
    %v1007 = vsel %vm340, %v1005, %v987
    %1008 = vst.msk [vmem:[#allocation6 + $0x20] sm:$0xff] %vm340, %v996
    %1009 = vst.msk [vmem:[#allocation6 + $0x18] sm:$0xff] %vm348, %v1000
    %v1010 = vpack.c.bf16 %v1002, %v1002
    %v1011 = vld [vmem:[%s2] sm:$0xff]
    %v1012 = vld [vmem:[%s2 + $0x8] sm:$0xff]
    %v1013 = vld [vmem:[%s2 + $0x10] sm:$0xff]
    %v1014 = vld [vmem:[%s2 + $0x18] sm:$0xff]
    %v1015 = vld [vmem:[%s2 + $0x20] sm:$0xff]
    %v1016 = vld [vmem:[%s2 + $0x28] sm:$0xff]
    %v1017 = vld [vmem:[%s2 + $0x30] sm:$0xff]
    %v1018 = vld [vmem:[%s2 + $0x38] sm:$0xff]
    %v1027 = vunpack.c.l.b16 %v1011
    %v1028 = vunpack.c.h.b16 %v1011
    %v1029 = vunpack.c.l.b16 %v1012
    %v1030 = vunpack.c.h.b16 %v1012
    %v1031 = vunpack.c.l.b16 %v1013
    %v1032 = vunpack.c.h.b16 %v1013
    %v1033 = vunpack.c.l.b16 %v1014
    %v1034 = vunpack.c.h.b16 %v1014
    %v1035 = vunpack.c.l.b16 %v1015
    %v1036 = vunpack.c.h.b16 %v1015
    %v1037 = vunpack.c.l.b16 %v1016
    %v1038 = vunpack.c.h.b16 %v1016
    %v1039 = vunpack.c.l.b16 %v1017
    %v1040 = vunpack.c.h.b16 %v1017
    %v1041 = vunpack.c.l.b16 %v1018
    %v1042 = vunpack.c.h.b16 %v1018
    %v1043 = vpack.c.b16 %v1029, %v1027
    %v1044 = vpack.c.b16 %v1030, %v1028
    %v1045 = vpack.c.b16 %v1033, %v1031
    %v1046 = vpack.c.b16 %v1034, %v1032
    %v1047 = vpack.c.b16 %v1037, %v1035
    %v1048 = vpack.c.b16 %v1038, %v1036
    %v1049 = vpack.c.b16 %v1041, %v1039
    %v1050 = vpack.c.b16 %v1042, %v1040
    %v1060 = vsel %vm231, %v1010, 0
    %1062 = vmatprep.subr.bf16.mxu0 %v1044
    %1063 = vmatpush1.bf16.msra.mxu0 %v1043
    %1064 = vmatprep.subr.bf16.mxu0 %v1046
    %1065 = vmatpush1.bf16.msra.mxu0 %v1045
    %1066 = vmatprep.subr.bf16.mxu0 %v1048
    %1067 = vmatpush1.bf16.msra.mxu0 %v1047
    %1068 = vmatprep.subr.bf16.mxu0 %v1050
    %1069 = vmatpush1.bf16.msra.mxu0 %v1049
    %1070 = vmatprep.subr.bf16.mxu0 0
    %1071 = vmatpush1.bf16.msra.mxu0 0
    %1072 = vmatprep.subr.bf16.mxu0 0
    %1073 = vmatpush1.bf16.msra.mxu0 0
    %1074 = vmatprep.subr.bf16.mxu0 0
    %1075 = vmatpush1.bf16.msra.mxu0 0
    %1076 = vmatprep.subr.bf16.mxu0 0
    %1077 = vmatpush1.bf16.msra.mxu0 0
    %1078 = vmatprep.subr.bf16.mxu0 0
    %1079 = vmatpush1.bf16.msra.mxu0 0
    %1080 = vmatprep.subr.bf16.mxu0 0
    %1081 = vmatpush1.bf16.msra.mxu0 0
    %1082 = vmatprep.subr.bf16.mxu0 0
    %1083 = vmatpush1.bf16.msra.mxu0 0
    %1084 = vmatprep.subr.bf16.mxu0 0
    %1085 = vmatpush1.bf16.msra.mxu0 0
    %1086 = vmatprep.subr.bf16.mxu0 0
    %1087 = vmatpush1.bf16.msra.mxu0 0
    %1088 = vmatprep.subr.bf16.mxu0 0
    %1089 = vmatpush1.bf16.msra.mxu0 0
    %1090 = vmatprep.subr.bf16.mxu0 0
    %1091 = vmatpush1.bf16.msra.mxu0 0
    %1092 = vmatprep.subr.bf16.mxu0 0
    %1093 = vmatpush1.bf16.msra.mxu0 0
    %1094 = vmatprep.mubr.bf16.mxu0 0
    %1095 = vmatmul.mubr.bf16.gmra.mrb[0].mxu0 %v1060
    %v1096 = vpop.f32.mrb[0].mxu0
    %v1097 = vadd.f32 0.0, %v1096
    %v1098 = vpop.f32.mrb[0].mxu0
    %v1099 = vadd.f32 0.0, %v1098
    %v1100 = vpop.f32.mrb[0].mxu0
    %v1101 = vpop.f32.mrb[0].mxu0
    %1102 = vdwg.mxu0
    %v1103 = vld [vmem:[#allocation2 + $0x50] sm:$0xff]
    %v1104 = vadd.f32 %v1103, %v1097
    %v1105 = vld [vmem:[#allocation2 + $0x28] sm:$0xff]
    %v1106 = vadd.f32 %v1105, %v1099
    %v1107 = vxor.u32 %v1104, 2147483648
    %v1108 = vmul.f32 %v1107, 1.442695
    %v1109 = vpow.pop %v1108
    %v1110 = vadd.f32 %v1109, 1.0
    %v1111 = vrcp.pop %v1110
    %v1112 = vmul.f32 1.0, %v1111
    %v1113 = vtanh.pop %v1104
    %1115 = vrot.lane.b32.xlu0 %v1007, 32
    %v1116 = vpop.permute.xlu0 %1115
    %v1118 = vmul.f32 %v1112, %v1116
    %1120 = vrot.lane.b32.xlu0 %v1113, 32
    %v1121 = vpop.permute.xlu0 %1120
    %v1123 = vmul.f32 %v1112, %v1121
    %1125 = vrot.lane.b32.xlu0 %v1123, 32
    %v1126 = vpop.permute.xlu0 %1125
    %v1128 = vadd.f32 %v1118, %v1126
    %v1129 = vtanh.pop %v1128
    %1131 = vrot.lane.b32.xlu0 %v1129, 32
    %v1132 = vpop.permute.xlu0 %1131
    %v1134 = vmul.f32 %v1112, %v1132
    %v1135 = vxor.u32 %v1106, 2147483648
    %v1136 = vmul.f32 %v1135, 1.442695
    %v1137 = vpow.pop %v1136
    %v1138 = vadd.f32 %v1137, 1.0
    %v1139 = vrcp.pop %v1138
    %v1140 = vmul.f32 1.0, %v1139
    %v1141 = vtanh.pop %v1106
    %v1142 = vmul.f32 %v1140, %v1007
    %1144 = vrot.lane.b32.xlu0 %v1141, 32
    %v1145 = vpop.permute.xlu0 %1144
    %v1147 = vmul.f32 %v1140, %v1145
    %1149 = vrot.lane.b32.xlu0 %v1147, 32
    %v1150 = vpop.permute.xlu0 %1149
    %v1152 = vadd.f32 %v1142, %v1150
    %v1153 = vtanh.pop %v1152
    %1155 = vrot.lane.b32.xlu0 %v1153, 32
    %v1156 = vpop.permute.xlu0 %1155
    %v1158 = vmul.f32 %v1140, %v1156
    %1160 = vrot.lane.b32.xlu0 %v1134, 64
    %v1161 = vpop.permute.xlu0 %1160
    %1164 = vrot.lane.b32.xlu0 %v1158, 96
    %v1165 = vpop.permute.xlu0 %1164
    %v1167 = vsel %vm340, %v1161, %v1165
    %1169 = vrot.lane.b32.xlu0 %v1128, 96
    %v1170 = vpop.permute.xlu0 %1169
    %v1172 = vsel %vm340, %v1170, %v1152
    %1173 = vst.msk [vmem:[#allocation6 + $0x28] sm:$0xff] %vm340, %v1161
    %1174 = vst.msk [vmem:[#allocation6 + $0x10] sm:$0xff] %vm348, %v1165
    %v1175 = vpack.c.bf16 %v1167, %v1167
    %v1176 = vld [vmem:[%s2] sm:$0xff]
    %v1177 = vld [vmem:[%s2 + $0x8] sm:$0xff]
    %v1178 = vld [vmem:[%s2 + $0x10] sm:$0xff]
    %v1179 = vld [vmem:[%s2 + $0x18] sm:$0xff]
    %v1180 = vld [vmem:[%s2 + $0x20] sm:$0xff]
    %v1181 = vld [vmem:[%s2 + $0x28] sm:$0xff]
    %v1182 = vld [vmem:[%s2 + $0x30] sm:$0xff]
    %v1183 = vld [vmem:[%s2 + $0x38] sm:$0xff]
    %v1192 = vunpack.c.l.b16 %v1176
    %v1193 = vunpack.c.h.b16 %v1176
    %v1194 = vunpack.c.l.b16 %v1177
    %v1195 = vunpack.c.h.b16 %v1177
    %v1196 = vunpack.c.l.b16 %v1178
    %v1197 = vunpack.c.h.b16 %v1178
    %v1198 = vunpack.c.l.b16 %v1179
    %v1199 = vunpack.c.h.b16 %v1179
    %v1200 = vunpack.c.l.b16 %v1180
    %v1201 = vunpack.c.h.b16 %v1180
    %v1202 = vunpack.c.l.b16 %v1181
    %v1203 = vunpack.c.h.b16 %v1181
    %v1204 = vunpack.c.l.b16 %v1182
    %v1205 = vunpack.c.h.b16 %v1182
    %v1206 = vunpack.c.l.b16 %v1183
    %v1207 = vunpack.c.h.b16 %v1183
    %v1208 = vpack.c.b16 %v1194, %v1192
    %v1209 = vpack.c.b16 %v1195, %v1193
    %v1210 = vpack.c.b16 %v1198, %v1196
    %v1211 = vpack.c.b16 %v1199, %v1197
    %v1212 = vpack.c.b16 %v1202, %v1200
    %v1213 = vpack.c.b16 %v1203, %v1201
    %v1214 = vpack.c.b16 %v1206, %v1204
    %v1215 = vpack.c.b16 %v1207, %v1205
    %v1225 = vsel %vm231, %v1175, 0
    %1227 = vmatprep.subr.bf16.mxu0 %v1209
    %1228 = vmatpush1.bf16.msra.mxu0 %v1208
    %1229 = vmatprep.subr.bf16.mxu0 %v1211
    %1230 = vmatpush1.bf16.msra.mxu0 %v1210
    %1231 = vmatprep.subr.bf16.mxu0 %v1213
    %1232 = vmatpush1.bf16.msra.mxu0 %v1212
    %1233 = vmatprep.subr.bf16.mxu0 %v1215
    %1234 = vmatpush1.bf16.msra.mxu0 %v1214
    %1235 = vmatprep.subr.bf16.mxu0 0
    %1236 = vmatpush1.bf16.msra.mxu0 0
    %1237 = vmatprep.subr.bf16.mxu0 0
    %1238 = vmatpush1.bf16.msra.mxu0 0
    %1239 = vmatprep.subr.bf16.mxu0 0
    %1240 = vmatpush1.bf16.msra.mxu0 0
    %1241 = vmatprep.subr.bf16.mxu0 0
    %1242 = vmatpush1.bf16.msra.mxu0 0
    %1243 = vmatprep.subr.bf16.mxu0 0
    %1244 = vmatpush1.bf16.msra.mxu0 0
    %1245 = vmatprep.subr.bf16.mxu0 0
    %1246 = vmatpush1.bf16.msra.mxu0 0
    %1247 = vmatprep.subr.bf16.mxu0 0
    %1248 = vmatpush1.bf16.msra.mxu0 0
    %1249 = vmatprep.subr.bf16.mxu0 0
    %1250 = vmatpush1.bf16.msra.mxu0 0
    %1251 = vmatprep.subr.bf16.mxu0 0
    %1252 = vmatpush1.bf16.msra.mxu0 0
    %1253 = vmatprep.subr.bf16.mxu0 0
    %1254 = vmatpush1.bf16.msra.mxu0 0
    %1255 = vmatprep.subr.bf16.mxu0 0
    %1256 = vmatpush1.bf16.msra.mxu0 0
    %1257 = vmatprep.subr.bf16.mxu0 0
    %1258 = vmatpush1.bf16.msra.mxu0 0
    %1259 = vmatprep.mubr.bf16.mxu0 0
    %1260 = vmatmul.mubr.bf16.gmra.mrb[0].mxu0 %v1225
    %v1261 = vpop.f32.mrb[0].mxu0
    %v1262 = vadd.f32 0.0, %v1261
    %v1263 = vpop.f32.mrb[0].mxu0
    %v1264 = vadd.f32 0.0, %v1263
    %v1265 = vpop.f32.mrb[0].mxu0
    %v1266 = vpop.f32.mrb[0].mxu0
    %1267 = vdwg.mxu0
    %v1268 = vld [vmem:[#allocation2 + $0x60] sm:$0xff]
    %v1269 = vadd.f32 %v1268, %v1262
    %v1270 = vld [vmem:[#allocation2 + $0x18] sm:$0xff]
    %v1271 = vadd.f32 %v1270, %v1264
    %v1272 = vxor.u32 %v1269, 2147483648
    %v1273 = vmul.f32 %v1272, 1.442695
    %v1274 = vpow.pop %v1273
    %v1275 = vadd.f32 %v1274, 1.0
    %v1276 = vrcp.pop %v1275
    %v1277 = vmul.f32 1.0, %v1276
    %v1278 = vtanh.pop %v1269
    %1280 = vrot.lane.b32.xlu0 %v1172, 32
    %v1281 = vpop.permute.xlu0 %1280
    %v1283 = vmul.f32 %v1277, %v1281
    %1285 = vrot.lane.b32.xlu0 %v1278, 32
    %v1286 = vpop.permute.xlu0 %1285
    %v1288 = vmul.f32 %v1277, %v1286
    %1290 = vrot.lane.b32.xlu0 %v1288, 32
    %v1291 = vpop.permute.xlu0 %1290
    %v1293 = vadd.f32 %v1283, %v1291
    %v1294 = vtanh.pop %v1293
    %1296 = vrot.lane.b32.xlu0 %v1294, 32
    %v1297 = vpop.permute.xlu0 %1296
    %v1299 = vmul.f32 %v1277, %v1297
    %v1300 = vxor.u32 %v1271, 2147483648
    %v1301 = vmul.f32 %v1300, 1.442695
    %v1302 = vpow.pop %v1301
    %v1303 = vadd.f32 %v1302, 1.0
    %v1304 = vrcp.pop %v1303
    %v1305 = vmul.f32 1.0, %v1304
    %v1306 = vtanh.pop %v1271
    %v1307 = vmul.f32 %v1305, %v1172
    %1309 = vrot.lane.b32.xlu0 %v1306, 32
    %v1310 = vpop.permute.xlu0 %1309
    %v1312 = vmul.f32 %v1305, %v1310
    %1314 = vrot.lane.b32.xlu0 %v1312, 32
    %v1315 = vpop.permute.xlu0 %1314
    %v1317 = vadd.f32 %v1307, %v1315
    %v1318 = vtanh.pop %v1317
    %1320 = vrot.lane.b32.xlu0 %v1318, 32
    %v1321 = vpop.permute.xlu0 %1320
    %v1323 = vmul.f32 %v1305, %v1321
    %1325 = vrot.lane.b32.xlu0 %v1299, 64
    %v1326 = vpop.permute.xlu0 %1325
    %1329 = vrot.lane.b32.xlu0 %v1323, 96
    %v1330 = vpop.permute.xlu0 %1329
    %v1332 = vsel %vm340, %v1326, %v1330
    %1334 = vrot.lane.b32.xlu0 %v1293, 96
    %v1335 = vpop.permute.xlu0 %1334
    %v1337 = vsel %vm340, %v1335, %v1317
    %1338 = vst.msk [vmem:[#allocation6 + $0x30] sm:$0xff] %vm340, %v1326
    %1339 = vst.msk [vmem:[#allocation6 + $0x8] sm:$0xff] %vm348, %v1330
    %v1340 = vpack.c.bf16 %v1332, %v1332
    %v1341 = vld [vmem:[%s2] sm:$0xff]
    %v1342 = vld [vmem:[%s2 + $0x8] sm:$0xff]
    %v1343 = vld [vmem:[%s2 + $0x10] sm:$0xff]
    %v1344 = vld [vmem:[%s2 + $0x18] sm:$0xff]
    %v1345 = vld [vmem:[%s2 + $0x20] sm:$0xff]
    %v1346 = vld [vmem:[%s2 + $0x28] sm:$0xff]
    %v1347 = vld [vmem:[%s2 + $0x30] sm:$0xff]
    %v1348 = vld [vmem:[%s2 + $0x38] sm:$0xff]
    %v1357 = vunpack.c.l.b16 %v1341
    %v1358 = vunpack.c.h.b16 %v1341
    %v1359 = vunpack.c.l.b16 %v1342
    %v1360 = vunpack.c.h.b16 %v1342
    %v1361 = vunpack.c.l.b16 %v1343
    %v1362 = vunpack.c.h.b16 %v1343
    %v1363 = vunpack.c.l.b16 %v1344
    %v1364 = vunpack.c.h.b16 %v1344
    %v1365 = vunpack.c.l.b16 %v1345
    %v1366 = vunpack.c.h.b16 %v1345
    %v1367 = vunpack.c.l.b16 %v1346
    %v1368 = vunpack.c.h.b16 %v1346
    %v1369 = vunpack.c.l.b16 %v1347
    %v1370 = vunpack.c.h.b16 %v1347
    %v1371 = vunpack.c.l.b16 %v1348
    %v1372 = vunpack.c.h.b16 %v1348
    %v1373 = vpack.c.b16 %v1359, %v1357
    %v1374 = vpack.c.b16 %v1360, %v1358
    %v1375 = vpack.c.b16 %v1363, %v1361
    %v1376 = vpack.c.b16 %v1364, %v1362
    %v1377 = vpack.c.b16 %v1367, %v1365
    %v1378 = vpack.c.b16 %v1368, %v1366
    %v1379 = vpack.c.b16 %v1371, %v1369
    %v1380 = vpack.c.b16 %v1372, %v1370
    %v1390 = vsel %vm231, %v1340, 0
    %1392 = vmatprep.subr.bf16.mxu0 %v1374
    %1393 = vmatpush1.bf16.msra.mxu0 %v1373
    %1394 = vmatprep.subr.bf16.mxu0 %v1376
    %1395 = vmatpush1.bf16.msra.mxu0 %v1375
    %1396 = vmatprep.subr.bf16.mxu0 %v1378
    %1397 = vmatpush1.bf16.msra.mxu0 %v1377
    %1398 = vmatprep.subr.bf16.mxu0 %v1380
    %1399 = vmatpush1.bf16.msra.mxu0 %v1379
    %1400 = vmatprep.subr.bf16.mxu0 0
    %1401 = vmatpush1.bf16.msra.mxu0 0
    %1402 = vmatprep.subr.bf16.mxu0 0
    %1403 = vmatpush1.bf16.msra.mxu0 0
    %1404 = vmatprep.subr.bf16.mxu0 0
    %1405 = vmatpush1.bf16.msra.mxu0 0
    %1406 = vmatprep.subr.bf16.mxu0 0
    %1407 = vmatpush1.bf16.msra.mxu0 0
    %1408 = vmatprep.subr.bf16.mxu0 0
    %1409 = vmatpush1.bf16.msra.mxu0 0
    %1410 = vmatprep.subr.bf16.mxu0 0
    %1411 = vmatpush1.bf16.msra.mxu0 0
    %1412 = vmatprep.subr.bf16.mxu0 0
    %1413 = vmatpush1.bf16.msra.mxu0 0
    %1414 = vmatprep.subr.bf16.mxu0 0
    %1415 = vmatpush1.bf16.msra.mxu0 0
    %1416 = vmatprep.subr.bf16.mxu0 0
    %1417 = vmatpush1.bf16.msra.mxu0 0
    %1418 = vmatprep.subr.bf16.mxu0 0
    %1419 = vmatpush1.bf16.msra.mxu0 0
    %1420 = vmatprep.subr.bf16.mxu0 0
    %1421 = vmatpush1.bf16.msra.mxu0 0
    %1422 = vmatprep.subr.bf16.mxu0 0
    %1423 = vmatpush1.bf16.msra.mxu0 0
    %1424 = vmatprep.mubr.bf16.mxu0 0
    %1425 = vmatmul.mubr.bf16.gmra.mrb[0].mxu0 %v1390
    %v1426 = vpop.f32.mrb[0].mxu0
    %v1427 = vadd.f32 0.0, %v1426
    %v1428 = vpop.f32.mrb[0].mxu0
    %v1429 = vadd.f32 0.0, %v1428
    %v1430 = vpop.f32.mrb[0].mxu0
    %v1431 = vpop.f32.mrb[0].mxu0
    %1432 = vdwg.mxu0
    %v1433 = vld [vmem:[#allocation2 + $0x70] sm:$0xff]
    %v1434 = vadd.f32 %v1433, %v1427
    %v1435 = vld [vmem:[#allocation2 + $0x8] sm:$0xff]
    %v1436 = vadd.f32 %v1435, %v1429
    %v1437 = vxor.u32 %v1434, 2147483648
    %v1438 = vmul.f32 %v1437, 1.442695
    %v1439 = vpow.pop %v1438
    %v1440 = vadd.f32 %v1439, 1.0
    %v1441 = vrcp.pop %v1440
    %v1442 = vmul.f32 1.0, %v1441
    %v1443 = vtanh.pop %v1434
    %1445 = vrot.lane.b32.xlu0 %v1337, 32
    %v1446 = vpop.permute.xlu0 %1445
    %v1448 = vmul.f32 %v1442, %v1446
    %1450 = vrot.lane.b32.xlu0 %v1443, 32
    %v1451 = vpop.permute.xlu0 %1450
    %v1453 = vmul.f32 %v1442, %v1451
    %1455 = vrot.lane.b32.xlu0 %v1453, 32
    %v1456 = vpop.permute.xlu0 %1455
    %v1458 = vadd.f32 %v1448, %v1456
    %v1459 = vtanh.pop %v1458
    %1461 = vrot.lane.b32.xlu0 %v1459, 32
    %v1462 = vpop.permute.xlu0 %1461
    %v1464 = vmul.f32 %v1442, %v1462
    %v1465 = vxor.u32 %v1436, 2147483648
    %v1466 = vmul.f32 %v1465, 1.442695
    %v1467 = vpow.pop %v1466
    %v1468 = vadd.f32 %v1467, 1.0
    %v1469 = vrcp.pop %v1468
    %v1470 = vmul.f32 1.0, %v1469
    %v1471 = vtanh.pop %v1436
    %v1472 = vmul.f32 %v1470, %v1337
    %1474 = vrot.lane.b32.xlu0 %v1471, 32
    %v1475 = vpop.permute.xlu0 %1474
    %v1477 = vmul.f32 %v1470, %v1475
    %1479 = vrot.lane.b32.xlu0 %v1477, 32
    %v1480 = vpop.permute.xlu0 %1479
    %v1482 = vadd.f32 %v1472, %v1480
    %v1483 = vtanh.pop %v1482
    %1485 = vrot.lane.b32.xlu0 %v1483, 32
    %v1486 = vpop.permute.xlu0 %1485
    %v1488 = vmul.f32 %v1470, %v1486
    %1490 = vrot.lane.b32.xlu0 %v1464, 64
    %v1491 = vpop.permute.xlu0 %1490
    %1493 = vst.msk [vmem:[#allocation6 + $0x38] sm:$0xff] %vm340, %v1491
    %1495 = vrot.lane.b32.xlu0 %v1488, 96
    %v1496 = vpop.permute.xlu0 %1495
    %1498 = vst.msk [vmem:[#allocation6] sm:$0xff] %vm348, %v1496
    // Predicated region
    $region30: #{tpu_custom_call.1} parent=1 // pred_check
      _
    $region31: #{tpu_custom_call.1} parent=1 // pred_check_branch
      %1500 = sbr.rel (0) target = $region33
    $region32: #{tpu_custom_call.1} parent=1 // pred_region
      %s1502 = ssub.s32 1024, 1024
      %1503 = vsyncadd [#allocation5], %s1502
      %s1504 = sshll.u32 [#allocation6], 4
      %s1505 = int_to_ptr.vmem [resolvable:$true] %s1504
      %1510 = dma.vmem_to_hbm [thread:$0]  %s1505, 1024, %s6, [#allocation5], 128, 128, 8
    $region33: #{tpu_custom_call.1} parent=1 // pred_fallthru
      _
    // Predicated region
    $region34: #{tpu_custom_call.1} parent=1 // pred_check
      _
    $region35: #{tpu_custom_call.1} parent=1 // pred_check_branch
      %1512 = sbr.rel (0) target = $region37
    $region36: #{tpu_custom_call.1} parent=1 // pred_region
      %1513 = dma.done [#allocation5], 1024
    $region37: #{tpu_custom_call.1} parent=1 // pred_fallthru
      _
    %1514 = vsyncpa [#allocation4], 1
    %1515 = vsyncpa [#allocation5], 1

</llo_original>
